<compile_context>
chip_gen: v7x
topology: tpu7x:2x2x1
jax: 0.10.0
libtpu: 0.0.40
codegen_flags: <defaults>
</compile_context>

<pallas_src>
import functools

import jax
import jax.numpy as jnp
from jax.experimental import pallas as pl
from jax.experimental.pallas import tpu as pltpu

LANE = 128


def _round_up(x, m):
    return (x + m - 1) // m * m


# ---------------------------------------------------------------------------
# Pallas kernel: one GCNConv layer on a row tile:  (A_tile @ H) @ W + b
# ---------------------------------------------------------------------------
def _gcn_layer_kernel(a_ref, h_ref, w_ref, b_ref, out_ref, *,
                      apply_relu, apply_log_softmax, valid_cols):
    # A row tile (TM, N_pad) bf16  @  full H (N_pad, F_in_pad) bf16 -> f32 acc
    ah = jnp.dot(a_ref[...], h_ref[...], preferred_element_type=jnp.float32)
    # (A H) @ W  (small second matmul, bf16 operands, f32 accumulate)
    h = jnp.dot(ah.astype(w_ref.dtype), w_ref[...],
                preferred_element_type=jnp.float32)
    h = h + b_ref[...]                      # bias add in f32

    if apply_relu:
        h = jnp.maximum(h, 0.0)
        # dropout -> identity (eval mode)

    if apply_log_softmax:
        # log_softmax over the class axis; padded lane columns must be masked
        # out of the max / sum reductions.
        col = jax.lax.broadcasted_iota(jnp.int32, h.shape, 1)
        valid = col < valid_cols
        h_masked = jnp.where(valid, h, -jnp.inf)
        m = jnp.max(h_masked, axis=1, keepdims=True)
        e = jnp.where(valid, jnp.exp(h - m), 0.0)
        lse = jnp.log(jnp.sum(e, axis=1, keepdims=True))
        h = h - m - lse

    out_ref[...] = h.astype(out_ref.dtype)


def _gcn_layer(a_pad, h_pad, w_pad, b_pad, *, apply_relu, apply_log_softmax,
               valid_cols, out_dtype, block_rows):
    n_pad = a_pad.shape[0]
    f_in = h_pad.shape[1]
    f_out = w_pad.shape[1]
    tm = block_rows
    assert n_pad % tm == 0 and tm % 8 == 0

    flops = 2 * n_pad * n_pad * f_in + 2 * n_pad * f_in * f_out
    bytes_accessed = (a_pad.size * a_pad.dtype.itemsize
                      + h_pad.size * h_pad.dtype.itemsize
                      + w_pad.size * w_pad.dtype.itemsize
                      + b_pad.size * b_pad.dtype.itemsize
                      + n_pad * f_out * jnp.dtype(out_dtype).itemsize)
    transcendentals = n_pad * f_out if apply_log_softmax else 0

    kernel = functools.partial(
        _gcn_layer_kernel,
        apply_relu=apply_relu,
        apply_log_softmax=apply_log_softmax,
        valid_cols=valid_cols,
    )

    return pl.pallas_call(
        kernel,
        out_shape=jax.ShapeDtypeStruct((n_pad, f_out), out_dtype),
        grid_spec=pltpu.PrefetchScalarGridSpec(
            num_scalar_prefetch=0,
            grid=(n_pad // tm,),
            in_specs=[
                pl.BlockSpec((tm, n_pad), lambda i: (i, 0)),      # A row tile
                pl.BlockSpec((n_pad, f_in), lambda i: (0, 0)),    # H (resident)
                pl.BlockSpec((f_in, f_out), lambda i: (0, 0)),    # W (resident)
                pl.BlockSpec((1, f_out), lambda i: (0, 0)),       # b (resident)
            ],
            out_specs=pl.BlockSpec((tm, f_out), lambda i: (i, 0)),
        ),
        compiler_params=pltpu.CompilerParams(
            dimension_semantics=("parallel",),
            vmem_limit_bytes=48 * 1024 * 1024,
        ),
        cost_estimate=pl.CostEstimate(
            flops=int(flops),
            transcendentals=int(transcendentals),
            bytes_accessed=int(bytes_accessed),
        ),
    )(a_pad, h_pad, w_pad, b_pad)


# ---------------------------------------------------------------------------
# Full 3-layer GCN forward (pads, runs 3 tiled pallas_calls, slices output)
# ---------------------------------------------------------------------------
def _pad2d(x, rows, cols, dtype):
    x = x.astype(dtype)
    return jnp.pad(x, ((0, rows - x.shape[0]), (0, cols - x.shape[1])))


@functools.partial(jax.jit, static_argnames=("block_rows",))
def gcn_forward(a_hat, x, w1, b1, w2, b2, w3, b3, *, block_rows=512):
    n, f_in = x.shape
    h1, h2, c = w1.shape[1], w2.shape[1], w3.shape[1]

    tm = min(_round_up(block_rows, 128), _round_up(n, 128))
    n_pad = _round_up(n, tm)
    f_in_p = _round_up(f_in, LANE)
    h1_p = _round_up(h1, LANE)
    h2_p = _round_up(h2, LANE)
    c_p = _round_up(c, LANE)

    # Matmul operands in bf16 (MXU), biases in f32 (VPU add).
    a_p = _pad2d(a_hat, n_pad, n_pad, jnp.bfloat16)
    x_p = _pad2d(x, n_pad, f_in_p, jnp.bfloat16)
    w1_p = _pad2d(w1, f_in_p, h1_p, jnp.bfloat16)
    w2_p = _pad2d(w2, h1_p, h2_p, jnp.bfloat16)
    w3_p = _pad2d(w3, h2_p, c_p, jnp.bfloat16)
    b1_p = _pad2d(b1.reshape(1, -1), 1, h1_p, jnp.float32)
    b2_p = _pad2d(b2.reshape(1, -1), 1, h2_p, jnp.float32)
    b3_p = _pad2d(b3.reshape(1, -1), 1, c_p, jnp.float32)

    h = _gcn_layer(a_p, x_p, w1_p, b1_p, apply_relu=True,
                   apply_log_softmax=False, valid_cols=h1,
                   out_dtype=jnp.bfloat16, block_rows=tm)
    h = _gcn_layer(a_p, h, w2_p, b2_p, apply_relu=True,
                   apply_log_softmax=False, valid_cols=h2,
                   out_dtype=jnp.bfloat16, block_rows=tm)
    out = _gcn_layer(a_p, h, w3_p, b3_p, apply_relu=False,
                     apply_log_softmax=True, valid_cols=c,
                     out_dtype=jnp.float32, block_rows=tm)
    return out[:n, :c]


# ---------------------------------------------------------------------------
# Glue: dense symmetric-normalized adjacency (PyG gcn_norm semantics)
# ---------------------------------------------------------------------------
def normalized_adjacency(edge_index, num_nodes):
    src, dst = edge_index[0], edge_index[1]
    adj = jnp.zeros((num_nodes, num_nodes), jnp.float32)
    adj = adj.at[dst, src].set(1.0)        # aggregate src features into dst
    adj = adj.at[src, dst].set(1.0)        # undirected
    idx = jnp.arange(num_nodes)
    adj = adj.at[idx, idx].set(1.0)        # self-loops: diagonal exactly 1.0
    deg = jnp.sum(adj, axis=1)
    d_inv_sqrt = jnp.where(deg > 0, jax.lax.rsqrt(deg), 0.0)
    return adj * d_inv_sqrt[:, None] * d_inv_sqrt[None, :]


def glorot(key, shape):
    fan_in, fan_out = shape
    limit = jnp.sqrt(6.0 / (fan_in + fan_out))
    return jax.random.uniform(key, shape, jnp.float32, -limit, limit)


# ---------------------------------------------------------------------------
# Pure-JAX references
# ---------------------------------------------------------------------------
def reference_forward(a_hat, x, w1, b1, w2, b2, w3, b3, *, use_bf16):
    def layer(a, h, w, b):
        if use_bf16:
            a = a.astype(jnp.bfloat16)
            h = h.astype(jnp.bfloat16)
            w = w.astype(jnp.bfloat16)
            ah = jnp.dot(a, h, preferred_element_type=jnp.float32)
            return jnp.dot(ah.astype(jnp.bfloat16), w,
                           preferred_element_type=jnp.float32) + b
        return a @ (h @ w) + b

    h = jnp.maximum(layer(a_hat, x, w1, b1), 0.0)
    if use_bf16:
        h = h.astype(jnp.bfloat16)
    h = jnp.maximum(layer(a_hat, h, w2, b2), 0.0)
    if use_bf16:
        h = h.astype(jnp.bfloat16)
    h = layer(a_hat, h, w3, b3)
    return jax.nn.log_softmax(h, axis=1)


if __name__ == "__main__":
    # Small synthetic graph: N nodes, F node features, C classes, E edges.
    N, F_IN, HID1, HID2, C, E = 300, 16, 30, 10, 8, 900

    key = jax.random.PRNGKey(0)
    k_x, k_e, k_w1, k_w2, k_w3 = jax.random.split(key, 5)

    x = jax.random.normal(k_x, (N, F_IN), jnp.float32)
    edge_index = jax.random.randint(k_e, (2, E), 0, N, jnp.int32)

    # PyG GCNConv init: glorot weight, zero bias.
    w1 = glorot(k_w1, (F_IN, HID1)); b1 = jnp.zeros((HID1,), jnp.float32)
    w2 = glorot(k_w2, (HID1, HID2)); b2 = jnp.zeros((HID2,), jnp.float32)
    w3 = glorot(k_w3, (HID2, C));    b3 = jnp.zeros((C,), jnp.float32)

    a_hat = normalized_adjacency(edge_index, N)

    # block_rows=128 here so the small test graph still exercises a multi-tile
    # row grid (N=300 -> N_pad=384 -> 3 row tiles); default is 512 for real N.
    out = gcn_forward(a_hat, x, w1, b1, w2, b2, w3, b3, block_rows=128)
    out = jax.block_until_ready(out)

    ref_bf16 = reference_forward(a_hat, x, w1, b1, w2, b2, w3, b3,
                                 use_bf16=True)
    ref_f32 = reference_forward(a_hat, x, w1, b1, w2, b2, w3, b3,
                                use_bf16=False)

    assert out.shape == (N, C)
    assert bool(jnp.all(jnp.isfinite(out)))
    # Tight check vs a matched-precision (bf16 matmul operands) reference.
    assert jnp.allclose(out, ref_bf16, atol=2e-2, rtol=2e-2)
    # Loose sanity check vs the full-f32 reference.
    assert jnp.allclose(out, ref_f32, atol=2e-1, rtol=2e-1)

    print("KERNEL_OK")
</pallas_src>

<mosaic_0001>
module attributes {stable_mosaic.version = 11 : i64} {
  func.func @_gcn_layer_kernel(%arg0: i32, %arg1: memref<128x384xbf16, #tpu.memory_space<vmem>>, %arg2: memref<384x128xbf16, #tpu.memory_space<vmem>>, %arg3: memref<128x128xbf16, #tpu.memory_space<vmem>>, %arg4: memref<1x128xf32, #tpu.memory_space<vmem>>, %arg5: memref<128x128xbf16, #tpu.memory_space<vmem>>) attributes {dimension_semantics = [#tpu.dimension_semantics<parallel>], iteration_bounds = array<i64: 3>, scalar_prefetch = 0 : i64, scratch_operands = 0 : i64, tpu.core_type = #tpu.core_type<tc>, window_params = [{transform_indices = @transform_0, window_bounds = array<i64: 128, 384>}, {pipeline_mode = #tpu.pipeline_mode<synchronous>, transform_indices = @transform_1, window_bounds = array<i64: 384, 128>}, {pipeline_mode = #tpu.pipeline_mode<synchronous>, transform_indices = @transform_2, window_bounds = array<i64: 128, 128>}, {pipeline_mode = #tpu.pipeline_mode<synchronous>, transform_indices = @transform_3, window_bounds = array<i64: 1, 128>}, {transform_indices = @transform_4, window_bounds = array<i64: 128, 128>}]} {
    %c0 = arith.constant 0 : index
    %c0_0 = arith.constant 0 : index
    %0 = vector.load %arg1[%c0, %c0_0] : memref<128x384xbf16, #tpu.memory_space<vmem>>, vector<128x384xbf16>
    %c0_1 = arith.constant 0 : index
    %c0_2 = arith.constant 0 : index
    %1 = vector.load %arg2[%c0_1, %c0_2] : memref<384x128xbf16, #tpu.memory_space<vmem>>, vector<384x128xbf16>
    %cst = arith.constant dense<0.000000e+00> : vector<128x128xf32>
    %2 = tpu.matmul %0, %1, %cst {dimension_numbers = #tpu.dot_dimension_numbers<[1], [0], [0], [1], [0, 0, 1, 1], [], []>} : vector<128x384xbf16>, vector<384x128xbf16>, vector<128x128xf32> -> vector<128x128xf32>
    %3 = arith.truncf %2 : vector<128x128xf32> to vector<128x128xbf16>
    %c0_3 = arith.constant 0 : index
    %c0_4 = arith.constant 0 : index
    %4 = vector.load %arg3[%c0_3, %c0_4] : memref<128x128xbf16, #tpu.memory_space<vmem>>, vector<128x128xbf16>
    %cst_5 = arith.constant dense<0.000000e+00> : vector<128x128xf32>
    %5 = tpu.matmul %3, %4, %cst_5 {dimension_numbers = #tpu.dot_dimension_numbers<[1], [0], [0], [1], [0, 0, 1, 1], [], []>} : vector<128x128xbf16>, vector<128x128xbf16>, vector<128x128xf32> -> vector<128x128xf32>
    %c0_6 = arith.constant 0 : index
    %c0_7 = arith.constant 0 : index
    %6 = vector.load %arg4[%c0_6, %c0_7] : memref<1x128xf32, #tpu.memory_space<vmem>>, vector<1x128xf32>
    %7 = vector.broadcast %6 : vector<1x128xf32> to vector<128x128xf32>
    %8 = arith.addf %5, %7 : vector<128x128xf32>
    %cst_8 = arith.constant 0.000000e+00 : f32
    %9 = vector.broadcast %cst_8 : f32 to vector<128x128xf32>
    %10 = arith.maximumf %8, %9 : vector<128x128xf32>
    %11 = arith.truncf %10 : vector<128x128xf32> to vector<128x128xbf16>
    %c0_9 = arith.constant 0 : index
    %c0_10 = arith.constant 0 : index
    %12 = vector.load %arg5[%c0_9, %c0_10] : memref<128x128xbf16, #tpu.memory_space<vmem>>, vector<128x128xbf16>
    tpu.vector_store %arg5[%c0_9, %c0_10], %11 {strides = array<i32>} : memref<128x128xbf16, #tpu.memory_space<vmem>>, vector<128x128xbf16>,
    return
  }
  func.func @transform_0(%arg0: i32) -> (i32, i32) {
    %c0_i32 = arith.constant 0 : i32
    %c0_i32_0 = arith.constant 0 : i32
    return %arg0, %c0_i32 : i32, i32
  }
  func.func @transform_1(%arg0: i32) -> (i32, i32) {
    %c0_i32 = arith.constant 0 : i32
    %c0_i32_0 = arith.constant 0 : i32
    %c0_i32_1 = arith.constant 0 : i32
    return %c0_i32, %c0_i32_0 : i32, i32
  }
  func.func @transform_2(%arg0: i32) -> (i32, i32) {
    %c0_i32 = arith.constant 0 : i32
    %c0_i32_0 = arith.constant 0 : i32
    %c0_i32_1 = arith.constant 0 : i32
    return %c0_i32, %c0_i32_0 : i32, i32
  }
  func.func @transform_3(%arg0: i32) -> (i32, i32) {
    %c0_i32 = arith.constant 0 : i32
    %c0_i32_0 = arith.constant 0 : i32
    %c0_i32_1 = arith.constant 0 : i32
    return %c0_i32, %c0_i32_0 : i32, i32
  }
  func.func @transform_4(%arg0: i32) -> (i32, i32) {
    %c0_i32 = arith.constant 0 : i32
    %c0_i32_0 = arith.constant 0 : i32
    return %arg0, %c0_i32 : i32, i32
  }
}

module attributes {stable_mosaic.version = 11 : i64} {
  func.func @_gcn_layer_kernel(%arg0: i32, %arg1: memref<128x384xbf16, #tpu.memory_space<vmem>>, %arg2: memref<384x128xbf16, #tpu.memory_space<vmem>>, %arg3: memref<128x128xbf16, #tpu.memory_space<vmem>>, %arg4: memref<1x128xf32, #tpu.memory_space<vmem>>, %arg5: memref<128x128xf32, #tpu.memory_space<vmem>>) attributes {dimension_semantics = [#tpu.dimension_semantics<parallel>], iteration_bounds = array<i64: 3>, scalar_prefetch = 0 : i64, scratch_operands = 0 : i64, tpu.core_type = #tpu.core_type<tc>, window_params = [{transform_indices = @transform_0, window_bounds = array<i64: 128, 384>}, {pipeline_mode = #tpu.pipeline_mode<synchronous>, transform_indices = @transform_1, window_bounds = array<i64: 384, 128>}, {pipeline_mode = #tpu.pipeline_mode<synchronous>, transform_indices = @transform_2, window_bounds = array<i64: 128, 128>}, {pipeline_mode = #tpu.pipeline_mode<synchronous>, transform_indices = @transform_3, window_bounds = array<i64: 1, 128>}, {transform_indices = @transform_4, window_bounds = array<i64: 128, 128>}]} {
    %c0 = arith.constant 0 : index
    %c0_0 = arith.constant 0 : index
    %0 = vector.load %arg1[%c0, %c0_0] : memref<128x384xbf16, #tpu.memory_space<vmem>>, vector<128x384xbf16>
    %c0_1 = arith.constant 0 : index
    %c0_2 = arith.constant 0 : index
    %1 = vector.load %arg2[%c0_1, %c0_2] : memref<384x128xbf16, #tpu.memory_space<vmem>>, vector<384x128xbf16>
    %cst = arith.constant dense<0.000000e+00> : vector<128x128xf32>
    %2 = tpu.matmul %0, %1, %cst {dimension_numbers = #tpu.dot_dimension_numbers<[1], [0], [0], [1], [0, 0, 1, 1], [], []>} : vector<128x384xbf16>, vector<384x128xbf16>, vector<128x128xf32> -> vector<128x128xf32>
    %3 = arith.truncf %2 : vector<128x128xf32> to vector<128x128xbf16>
    %c0_3 = arith.constant 0 : index
    %c0_4 = arith.constant 0 : index
    %4 = vector.load %arg3[%c0_3, %c0_4] : memref<128x128xbf16, #tpu.memory_space<vmem>>, vector<128x128xbf16>
    %cst_5 = arith.constant dense<0.000000e+00> : vector<128x128xf32>
    %5 = tpu.matmul %3, %4, %cst_5 {dimension_numbers = #tpu.dot_dimension_numbers<[1], [0], [0], [1], [0, 0, 1, 1], [], []>} : vector<128x128xbf16>, vector<128x128xbf16>, vector<128x128xf32> -> vector<128x128xf32>
    %c0_6 = arith.constant 0 : index
    %c0_7 = arith.constant 0 : index
    %6 = vector.load %arg4[%c0_6, %c0_7] : memref<1x128xf32, #tpu.memory_space<vmem>>, vector<1x128xf32>
    %7 = vector.broadcast %6 : vector<1x128xf32> to vector<128x128xf32>
    %8 = arith.addf %5, %7 : vector<128x128xf32>
    %9 = tpu.iota {dimensions = array<i32: 1>} : vector<128x128xi32>
    %c8_i32 = arith.constant 8 : i32
    %10 = vector.broadcast %c8_i32 : i32 to vector<128x128xi32>
    %11 = arith.cmpi slt, %9, %10 : vector<128x128xi32>
    %cst_8 = arith.constant 0xFF800000 : f32
    %12 = vector.broadcast %cst_8 : f32 to vector<128x128xf32>
    %13 = arith.select %11, %8, %12 : vector<128x128xi1>, vector<128x128xf32>
    %cst_9 = arith.constant dense<0xFF800000> : vector<128xf32>
    %14 = vector.multi_reduction <maximumf>, %13, %cst_9 [1] : vector<128x128xf32> to vector<128xf32>
    %15 = vector.shape_cast %14 : vector<128xf32> to vector<128x1xf32>
    %16 = vector.broadcast %15 : vector<128x1xf32> to vector<128x128xf32>
    %17 = arith.subf %8, %16 : vector<128x128xf32>
    %18 = math.exp %17 : vector<128x128xf32>
    %cst_10 = arith.constant 0.000000e+00 : f32
    %19 = vector.broadcast %cst_10 : f32 to vector<128x128xf32>
    %20 = arith.select %11, %18, %19 : vector<128x128xi1>, vector<128x128xf32>
    %cst_11 = arith.constant dense<0.000000e+00> : vector<128xf32>
    %21 = vector.multi_reduction <add>, %20, %cst_11 [1] : vector<128x128xf32> to vector<128xf32>
    %22 = vector.shape_cast %21 : vector<128xf32> to vector<128x1xf32>
    %23 = math.log %22 : vector<128x1xf32>
    %24 = vector.broadcast %15 : vector<128x1xf32> to vector<128x128xf32>
    %25 = arith.subf %8, %24 : vector<128x128xf32>
    %26 = vector.broadcast %23 : vector<128x1xf32> to vector<128x128xf32>
    %27 = arith.subf %25, %26 : vector<128x128xf32>
    %c0_12 = arith.constant 0 : index
    %c0_13 = arith.constant 0 : index
    %28 = vector.load %arg5[%c0_12, %c0_13] : memref<128x128xf32, #tpu.memory_space<vmem>>, vector<128x128xf32>
    tpu.vector_store %arg5[%c0_12, %c0_13], %27 {strides = array<i32>} : memref<128x128xf32, #tpu.memory_space<vmem>>, vector<128x128xf32>,
    return
  }
  func.func @transform_0(%arg0: i32) -> (i32, i32) {
    %c0_i32 = arith.constant 0 : i32
    %c0_i32_0 = arith.constant 0 : i32
    return %arg0, %c0_i32 : i32, i32
  }
  func.func @transform_1(%arg0: i32) -> (i32, i32) {
    %c0_i32 = arith.constant 0 : i32
    %c0_i32_0 = arith.constant 0 : i32
    %c0_i32_1 = arith.constant 0 : i32
    return %c0_i32, %c0_i32_0 : i32, i32
  }
  func.func @transform_2(%arg0: i32) -> (i32, i32) {
    %c0_i32 = arith.constant 0 : i32
    %c0_i32_0 = arith.constant 0 : i32
    %c0_i32_1 = arith.constant 0 : i32
    return %c0_i32, %c0_i32_0 : i32, i32
  }
  func.func @transform_3(%arg0: i32) -> (i32, i32) {
    %c0_i32 = arith.constant 0 : i32
    %c0_i32_0 = arith.constant 0 : i32
    %c0_i32_1 = arith.constant 0 : i32
    return %c0_i32, %c0_i32_0 : i32, i32
  }
  func.func @transform_4(%arg0: i32) -> (i32, i32) {
    %c0_i32 = arith.constant 0 : i32
    %c0_i32_0 = arith.constant 0 : i32
    return %arg0, %c0_i32 : i32, i32
  }
}

</mosaic_0001>

<llo_original>
// kernel: gcn_forward.3
$region0: #{gcn_forward.3}
  #allocation0 [shape = 'u32[]', space=smem, size = 0x4, offset = 0x4, fixed_abs, tag = 'smem constant byte address 0x4 - core index']
  #allocation1 [shape = 'u32[144,128]{1,0:T(1,128)}', space=vmem, size = 0x12000, scoped, tag = 'internal scratch']
  %s0 = inlined_call_operand.vmem [shape: bf16[384,384], index: 0, kind: input, shape index: {}]
  %s1 = inlined_call_operand.vmem [shape: bf16[384,128], index: 1, kind: input, shape index: {}]
  %s2 = inlined_call_operand.vmem [shape: bf16[128,128], index: 2, kind: input, shape index: {}]
  %s3 = inlined_call_operand.vmem [shape: f32[1,128], index: 3, kind: input, shape index: {}]
  %s4 = inlined_call_operand.vmem [shape: bf16[384,128], index: 4, kind: output, shape index: {}]
  %s5 = sld [smem:[#allocation0]]
  $region49: #{gcn_forward.3} parent=0
    _
  %s7 = ssub.s32 1, %s5
  %s8 = scalar_select 0, %s7, %s5
  loop: start=0, step=1, limit=5
  $region2: #{gcn_forward.3} parent=0 // loop_pre_header
    _
  $region3: #{gcn_forward.3} parent=0 // loop_header
    %s10 = sphi 0, %s14
    %p11 = scmp.ge.s32.totalorder %s10, 5
    %s20 = sphi 0, %s22
    %s23 = sphi 0, %s20
    %s24 = sphi 0, %s23
    %s40 = sphi 0, %s24
    %s44 = sphi 0, %s44
    %s46 = sphi 0, %s44
    %s47 = sphi 0, %s46
    %s61 = sphi 0, %s47
    %s65 = sphi 0, %s65
    %s67 = sphi 0, %s65
    %s68 = sphi 0, %s67
    %s82 = sphi 0, %s68
    %s86 = sphi 0, %s86
    %s88 = sphi 0, %s86
    %s89 = sphi 0, %s88
    %s103 = sphi 0, %s89
    %s109 = sphi 0, %s111
    %s112 = sphi 0, %s109
    %s113 = sphi 0, %s112
    %s129 = sphi 0, %s113
  $region4: #{gcn_forward.3} parent=0 // loop_header_branch
    %13 = sbr.rel (%p11) target = $region8
  $region5: #{gcn_forward.3} parent=0 // loop_body
    %s15 = ssub.s32 %s10, 1
    %s16 = ssub.s32 %s10, 2
    %s17 = sadd.s32 %s10, 1
    %s18 = ssub.s32 %s10, %s17
    %p19 = scmp.eq.s32.totalorder %s18, 0
    %s21 = sadd.s32 %s20, 1
    %s22 = scalar_select %p19, %s20, %s21
    %p25 = pneg %p19
    %p26 = scmp.eq.s32.totalorder %s10, 2
    %p27 = por %p25, %p26
    %p28 = scmp.ne.s32.totalorder %s20, %s23
    %p29 = scmp.eq.s32.totalorder %s10, 0
    %p30 = por %p28, %p29
    %p31 = scmp.ne.s32.totalorder %s20, %s23
    %p32 = scmp.eq.s32.totalorder %s15, 2
    %p33 = por %p31, %p32
    %p34 = scmp.ne.s32.totalorder %s23, %s24
    %p35 = scmp.eq.s32.totalorder %s15, 0
    %p36 = por %p34, %p35
    %p37 = scmp.ne.s32.totalorder %s23, %s24
    %p38 = scmp.eq.s32.totalorder %s16, 2
    %p39 = por %p37, %p38
    %p41 = scmp.ne.s32.totalorder %s24, %s40
    %p42 = scmp.eq.s32.totalorder %s16, 0
    %p43 = por %p41, %p42
    %s45 = sadd.s32 %s44, 1
    %p48 = scmp.eq.s32.totalorder %s10, 2
    %p49 = scmp.ne.s32.totalorder %s44, %s46
    %p50 = scmp.eq.s32.totalorder %s10, 0
    %p51 = por %p49, %p50
    %p52 = scmp.ne.s32.totalorder %s44, %s46
    %p53 = scmp.eq.s32.totalorder %s15, 2
    %p54 = por %p52, %p53
    %p55 = scmp.ne.s32.totalorder %s46, %s47
    %p56 = scmp.eq.s32.totalorder %s15, 0
    %p57 = por %p55, %p56
    %p58 = scmp.ne.s32.totalorder %s46, %s47
    %p59 = scmp.eq.s32.totalorder %s16, 2
    %p60 = por %p58, %p59
    %p62 = scmp.ne.s32.totalorder %s47, %s61
    %p63 = scmp.eq.s32.totalorder %s16, 0
    %p64 = por %p62, %p63
    %s66 = sadd.s32 %s65, 1
    %p69 = scmp.eq.s32.totalorder %s10, 2
    %p70 = scmp.ne.s32.totalorder %s65, %s67
    %p71 = scmp.eq.s32.totalorder %s10, 0
    %p72 = por %p70, %p71
    %p73 = scmp.ne.s32.totalorder %s65, %s67
    %p74 = scmp.eq.s32.totalorder %s15, 2
    %p75 = por %p73, %p74
    %p76 = scmp.ne.s32.totalorder %s67, %s68
    %p77 = scmp.eq.s32.totalorder %s15, 0
    %p78 = por %p76, %p77
    %p79 = scmp.ne.s32.totalorder %s67, %s68
    %p80 = scmp.eq.s32.totalorder %s16, 2
    %p81 = por %p79, %p80
    %p83 = scmp.ne.s32.totalorder %s68, %s82
    %p84 = scmp.eq.s32.totalorder %s16, 0
    %p85 = por %p83, %p84
    %s87 = sadd.s32 %s86, 1
    %p90 = scmp.eq.s32.totalorder %s10, 2
    %p91 = scmp.ne.s32.totalorder %s86, %s88
    %p92 = scmp.eq.s32.totalorder %s10, 0
    %p93 = por %p91, %p92
    %p94 = scmp.ne.s32.totalorder %s86, %s88
    %p95 = scmp.eq.s32.totalorder %s15, 2
    %p96 = por %p94, %p95
    %p97 = scmp.ne.s32.totalorder %s88, %s89
    %p98 = scmp.eq.s32.totalorder %s15, 0
    %p99 = por %p97, %p98
    %p100 = scmp.ne.s32.totalorder %s88, %s89
    %p101 = scmp.eq.s32.totalorder %s16, 2
    %p102 = por %p100, %p101
    %p104 = scmp.ne.s32.totalorder %s89, %s103
    %p105 = scmp.eq.s32.totalorder %s16, 0
    %p106 = por %p104, %p105
    %s107 = ssub.s32 %s10, %s17
    %p108 = scmp.eq.s32.totalorder %s107, 0
    %s110 = sadd.s32 %s109, 1
    %s111 = scalar_select %p108, %s109, %s110
    %p114 = pneg %p108
    %p115 = scmp.eq.s32.totalorder %s10, 2
    %p116 = por %p114, %p115
    %p117 = scmp.ne.s32.totalorder %s109, %s112
    %p118 = scmp.eq.s32.totalorder %s10, 0
    %p119 = por %p117, %p118
    %p120 = scmp.ne.s32.totalorder %s109, %s112
    %p121 = scmp.eq.s32.totalorder %s15, 2
    %p122 = por %p120, %p121
    %p123 = scmp.ne.s32.totalorder %s112, %s113
    %p124 = scmp.eq.s32.totalorder %s15, 0
    %p125 = por %p123, %p124
    %p126 = scmp.ne.s32.totalorder %s112, %s113
    %p127 = scmp.eq.s32.totalorder %s16, 2
    %p128 = por %p126, %p127
    %p130 = scmp.ne.s32.totalorder %s113, %s129
    %p131 = scmp.eq.s32.totalorder %s16, 0
    %p132 = por %p130, %p131
    %p133 = scmp.le.s32.totalorder 1, %s10
    %p134 = scmp.lt.s32.totalorder %s10, 4
    %p135 = pnand %p133, %p134
    %p136 = pneg %p135
    // Predicated region
    $region9: #{gcn_forward.3} parent=5 // pred_check
      _
    $region10: #{gcn_forward.3} parent=5 // pred_check_branch
      %138 = sbr.rel (%p135) target = $region12
    $region11: #{gcn_forward.3} parent=5 // pred_region
      %s139 = ssub.s32 %s10, 1
      // Predicated region
      $region13: #{gcn_forward.3} parent=11 // pred_check
        %p140 = pneg %p57
      $region14: #{gcn_forward.3} parent=11 // pred_check_branch
        %142 = sbr.rel (%p140) target = $region16
      $region15: #{gcn_forward.3} parent=11 // pred_region
        _
      $region16: #{gcn_forward.3} parent=11 // pred_fallthru
        _
      // Predicated region
      $region17: #{gcn_forward.3} parent=11 // pred_check
        %p143 = pneg %p78
      $region18: #{gcn_forward.3} parent=11 // pred_check_branch
        %145 = sbr.rel (%p143) target = $region20
      $region19: #{gcn_forward.3} parent=11 // pred_region
        _
      $region20: #{gcn_forward.3} parent=11 // pred_fallthru
        _
      // Predicated region
      $region21: #{gcn_forward.3} parent=11 // pred_check
        %p146 = pneg %p99
      $region22: #{gcn_forward.3} parent=11 // pred_check_branch
        %148 = sbr.rel (%p146) target = $region24
      $region23: #{gcn_forward.3} parent=11 // pred_region
        _
      $region24: #{gcn_forward.3} parent=11 // pred_fallthru
        _
    $region12: #{gcn_forward.3} parent=5 // pred_fallthru
      _
    %p149 = scmp.lt.s32.totalorder %s10, 3
    // Predicated region
    $region25: #{gcn_forward.3} parent=5 // pred_check
      %p150 = pneg %p149
    $region26: #{gcn_forward.3} parent=5 // pred_check_branch
      %152 = sbr.rel (%p150) target = $region28
    $region27: #{gcn_forward.3} parent=5 // pred_region
      // Predicated region
      $region29: #{gcn_forward.3} parent=27 // pred_check
        %p153 = pneg %p30
      $region30: #{gcn_forward.3} parent=27 // pred_check_branch
        %155 = sbr.rel (%p153) target = $region32
      $region31: #{gcn_forward.3} parent=27 // pred_region
        %s156 = smul.u32 16, %s10
        %p157 = scmp.lt.s32.totalorder %s156, 47
        %s158 = scalar_select %p157, %s156, 47
        %s159 = smul.addr %s158, 3
        %s160 = smul.addr %s159, 4
        %s161 = scalar_lea.vmem %s0, %s160
        %s162 = smul.u32 16, %s10
      $region32: #{gcn_forward.3} parent=27 // pred_fallthru
        _
    $region28: #{gcn_forward.3} parent=5 // pred_fallthru
      _
    %p163 = scmp.le.s32.totalorder 1, %s10
    %p164 = scmp.lt.s32.totalorder %s10, 4
    %p165 = pnand %p163, %p164
    %p166 = pneg %p165
    // Predicated region
    $region33: #{gcn_forward.3} parent=5 // pred_check
      _
    $region34: #{gcn_forward.3} parent=5 // pred_check_branch
      %168 = sbr.rel (%p165) target = $region36
    $region35: #{gcn_forward.3} parent=5 // pred_region
      %s169 = ssub.s32 %s10, 1
      %s170 = smul.u32 16, %s15
      %p171 = scmp.lt.s32.totalorder %s170, 47
      %s172 = scalar_select %p171, %s170, 47
      %s173 = smul.addr %s172, 3
      %s174 = smul.addr %s173, 4
      %s175 = scalar_lea.vmem %s0, %s174
      %p176 = pneg %p36
      %p177 = pneg %p33
      %p178 = pneg %p57
      %p179 = pneg %p54
      %p180 = pneg %p78
      %p181 = pneg %p75
      %p182 = pneg %p99
      %p183 = pneg %p96
      %p184 = pneg %p125
      %p185 = pneg %p122
      %s186 = smul.u32 16, %s15
      %p187 = scmp.lt.s32.totalorder %s186, 47
      %s188 = scalar_select %p187, %s186, 47
      %s189 = smul.addr %s188, 4
      %s190 = scalar_lea.vmem %s4, %s189
      %s191 = smul.u32 16, %s15
      %p192 = scmp.lt.s32.totalorder %s191, 47
      %s193 = scalar_select %p192, %s191, 47
      %s194 = smul.addr %s193, 3
      %s195 = smul.addr %s194, 4
      %s196 = scalar_lea.vmem %s0, %s195
      %s197 = smul.u32 16, %s15
      %s198 = smul.u32 16, %s15
      %p199 = scmp.lt.s32.totalorder %s198, 47
      %s200 = scalar_select %p199, %s198, 47
      %s201 = smul.addr %s200, 4
      %s202 = scalar_lea.vmem %s4, %s201
      %s203 = smul.u32 16, %s15
      %v205 = vld [vmem:[%s196] sm:$0xff]
      %v206 = vld [vmem:[%s196 + $0x8] sm:$0xf]
      %v207 = vld [vmem:[%s196 + $0xc] sm:$0xff]
      %v208 = vld [vmem:[%s196 + $0x14] sm:$0xf]
      %v209 = vld [vmem:[%s196 + $0x18] sm:$0xff]
      %v210 = vld [vmem:[%s196 + $0x20] sm:$0xf]
      %v211 = vld [vmem:[%s196 + $0x24] sm:$0xff]
      %v212 = vld [vmem:[%s196 + $0x2c] sm:$0xf]
      %v213 = vld [vmem:[%s196 + $0x30] sm:$0xff]
      %v214 = vld [vmem:[%s196 + $0x38] sm:$0xf]
      %v215 = vld [vmem:[%s196 + $0x3c] sm:$0xff]
      %v216 = vld [vmem:[%s196 + $0x44] sm:$0xf]
      %v217 = vld [vmem:[%s196 + $0x48] sm:$0xff]
      %v218 = vld [vmem:[%s196 + $0x50] sm:$0xf]
      %v219 = vld [vmem:[%s196 + $0x54] sm:$0xff]
      %v220 = vld [vmem:[%s196 + $0x5c] sm:$0xf]
      %v221 = vld [vmem:[%s196 + $0x60] sm:$0xff]
      %v222 = vld [vmem:[%s196 + $0x68] sm:$0xf]
      %v223 = vld [vmem:[%s196 + $0x6c] sm:$0xff]
      %v224 = vld [vmem:[%s196 + $0x74] sm:$0xf]
      %v225 = vld [vmem:[%s196 + $0x78] sm:$0xff]
      %v226 = vld [vmem:[%s196 + $0x80] sm:$0xf]
      %v227 = vld [vmem:[%s196 + $0x84] sm:$0xff]
      %v228 = vld [vmem:[%s196 + $0x8c] sm:$0xf]
      %v229 = vld [vmem:[%s196 + $0x90] sm:$0xff]
      %v230 = vld [vmem:[%s196 + $0x98] sm:$0xf]
      %v231 = vld [vmem:[%s196 + $0x9c] sm:$0xff]
      %v232 = vld [vmem:[%s196 + $0xa4] sm:$0xf]
      %v233 = vld [vmem:[%s196 + $0xa8] sm:$0xff]
      %v234 = vld [vmem:[%s196 + $0xb0] sm:$0xf]
      %v235 = vld [vmem:[%s196 + $0xb4] sm:$0xff]
      %v236 = vld [vmem:[%s196 + $0xbc] sm:$0xf]
      %v237 = vld [vmem:[%s1] sm:$0xf]
      %v238 = vld [vmem:[%s1 + $0x4] sm:$0xf]
      %v239 = vld [vmem:[%s1 + $0x8] sm:$0xf]
      %v240 = vld [vmem:[%s1 + $0xc] sm:$0xf]
      %v241 = vld [vmem:[%s1 + $0x10] sm:$0xf]
      %v242 = vld [vmem:[%s1 + $0x14] sm:$0xf]
      %v243 = vld [vmem:[%s1 + $0x18] sm:$0xf]
      %v244 = vld [vmem:[%s1 + $0x1c] sm:$0xf]
      %v245 = vld [vmem:[%s1 + $0x20] sm:$0xf]
      %v246 = vld [vmem:[%s1 + $0x24] sm:$0xf]
      %v247 = vld [vmem:[%s1 + $0x28] sm:$0xf]
      %v248 = vld [vmem:[%s1 + $0x2c] sm:$0xf]
      %v249 = vld [vmem:[%s1 + $0x30] sm:$0xf]
      %v250 = vld [vmem:[%s1 + $0x34] sm:$0xf]
      %v251 = vld [vmem:[%s1 + $0x38] sm:$0xf]
      %v252 = vld [vmem:[%s1 + $0x3c] sm:$0xf]
      %v253 = vld [vmem:[%s1 + $0x40] sm:$0xf]
      %v254 = vld [vmem:[%s1 + $0x44] sm:$0xf]
      %v255 = vld [vmem:[%s1 + $0x48] sm:$0xf]
      %v256 = vld [vmem:[%s1 + $0x4c] sm:$0xf]
      %v257 = vld [vmem:[%s1 + $0x50] sm:$0xf]
      %v258 = vld [vmem:[%s1 + $0x54] sm:$0xf]
      %v259 = vld [vmem:[%s1 + $0x58] sm:$0xf]
      %v260 = vld [vmem:[%s1 + $0x5c] sm:$0xf]
      %v261 = vld [vmem:[%s1 + $0x60] sm:$0xf]
      %v262 = vld [vmem:[%s1 + $0x64] sm:$0xf]
      %v263 = vld [vmem:[%s1 + $0x68] sm:$0xf]
      %v264 = vld [vmem:[%s1 + $0x6c] sm:$0xf]
      %v265 = vld [vmem:[%s1 + $0x70] sm:$0xf]
      %v266 = vld [vmem:[%s1 + $0x74] sm:$0xf]
      %v267 = vld [vmem:[%s1 + $0x78] sm:$0xf]
      %v268 = vld [vmem:[%s1 + $0x7c] sm:$0xf]
      %v269 = vld [vmem:[%s1 + $0x80] sm:$0xf]
      %v270 = vld [vmem:[%s1 + $0x84] sm:$0xf]
      %v271 = vld [vmem:[%s1 + $0x88] sm:$0xf]
      %v272 = vld [vmem:[%s1 + $0x8c] sm:$0xf]
      %v273 = vld [vmem:[%s1 + $0x90] sm:$0xf]
      %v274 = vld [vmem:[%s1 + $0x94] sm:$0xf]
      %v275 = vld [vmem:[%s1 + $0x98] sm:$0xf]
      %v276 = vld [vmem:[%s1 + $0x9c] sm:$0xf]
      %v277 = vld [vmem:[%s1 + $0xa0] sm:$0xf]
      %v278 = vld [vmem:[%s1 + $0xa4] sm:$0xf]
      %v279 = vld [vmem:[%s1 + $0xa8] sm:$0xf]
      %v280 = vld [vmem:[%s1 + $0xac] sm:$0xf]
      %v281 = vld [vmem:[%s1 + $0xb0] sm:$0xf]
      %v282 = vld [vmem:[%s1 + $0xb4] sm:$0xf]
      %v283 = vld [vmem:[%s1 + $0xb8] sm:$0xf]
      %v284 = vld [vmem:[%s1 + $0xbc] sm:$0xf]
      %v317 = vunpack.c.l.b16 %v205
      %v318 = vunpack.c.h.b16 %v205
      %v319 = vunpack.c.l.b16 %v206
      %v320 = vunpack.c.l.b16 %v207
      %v321 = vunpack.c.h.b16 %v207
      %v322 = vunpack.c.l.b16 %v208
      %v323 = vunpack.c.l.b16 %v209
      %v324 = vunpack.c.h.b16 %v209
      %v325 = vunpack.c.l.b16 %v210
      %v326 = vunpack.c.l.b16 %v211
      %v327 = vunpack.c.h.b16 %v211
      %v328 = vunpack.c.l.b16 %v212
      %v329 = vunpack.c.l.b16 %v213
      %v330 = vunpack.c.h.b16 %v213
      %v331 = vunpack.c.l.b16 %v214
      %v332 = vunpack.c.l.b16 %v215
      %v333 = vunpack.c.h.b16 %v215
      %v334 = vunpack.c.l.b16 %v216
      %v335 = vunpack.c.l.b16 %v217
      %v336 = vunpack.c.h.b16 %v217
      %v337 = vunpack.c.l.b16 %v218
      %v338 = vunpack.c.l.b16 %v219
      %v339 = vunpack.c.h.b16 %v219
      %v340 = vunpack.c.l.b16 %v220
      %v341 = vunpack.c.l.b16 %v221
      %v342 = vunpack.c.h.b16 %v221
      %v343 = vunpack.c.l.b16 %v222
      %v344 = vunpack.c.l.b16 %v223
      %v345 = vunpack.c.h.b16 %v223
      %v346 = vunpack.c.l.b16 %v224
      %v347 = vunpack.c.l.b16 %v225
      %v348 = vunpack.c.h.b16 %v225
      %v349 = vunpack.c.l.b16 %v226
      %v350 = vunpack.c.l.b16 %v227
      %v351 = vunpack.c.h.b16 %v227
      %v352 = vunpack.c.l.b16 %v228
      %v353 = vunpack.c.l.b16 %v229
      %v354 = vunpack.c.h.b16 %v229
      %v355 = vunpack.c.l.b16 %v230
      %v356 = vunpack.c.l.b16 %v231
      %v357 = vunpack.c.h.b16 %v231
      %v358 = vunpack.c.l.b16 %v232
      %v359 = vunpack.c.l.b16 %v233
      %v360 = vunpack.c.h.b16 %v233
      %v361 = vunpack.c.l.b16 %v234
      %v362 = vunpack.c.l.b16 %v235
      %v363 = vunpack.c.h.b16 %v235
      %v364 = vunpack.c.l.b16 %v236
      %v365 = vpack.c.b16 %v320, %v317
      %v366 = vpack.c.b16 %v321, %v318
      %v367 = vpack.c.b16 %v322, %v319
      %v368 = vpack.c.b16 %v326, %v323
      %v369 = vpack.c.b16 %v327, %v324
      %v370 = vpack.c.b16 %v328, %v325
      %v371 = vpack.c.b16 %v332, %v329
      %v372 = vpack.c.b16 %v333, %v330
      %v373 = vpack.c.b16 %v334, %v331
      %v374 = vpack.c.b16 %v338, %v335
      %v375 = vpack.c.b16 %v339, %v336
      %v376 = vpack.c.b16 %v340, %v337
      %v377 = vpack.c.b16 %v344, %v341
      %v378 = vpack.c.b16 %v345, %v342
      %v379 = vpack.c.b16 %v346, %v343
      %v380 = vpack.c.b16 %v350, %v347
      %v381 = vpack.c.b16 %v351, %v348
      %v382 = vpack.c.b16 %v352, %v349
      %v383 = vpack.c.b16 %v356, %v353
      %v384 = vpack.c.b16 %v357, %v354
      %v385 = vpack.c.b16 %v358, %v355
      %v386 = vpack.c.b16 %v362, %v359
      %v387 = vpack.c.b16 %v363, %v360
      %v388 = vpack.c.b16 %v364, %v361
      %v461 = vunpack.c.l.b16 %v237
      %v462 = vunpack.c.l.b16 %v238
      %v463 = vunpack.c.l.b16 %v239
      %v464 = vunpack.c.l.b16 %v240
      %v465 = vunpack.c.l.b16 %v241
      %v466 = vunpack.c.l.b16 %v242
      %v467 = vunpack.c.l.b16 %v243
      %v468 = vunpack.c.l.b16 %v244
      %v469 = vunpack.c.l.b16 %v245
      %v470 = vunpack.c.l.b16 %v246
      %v471 = vunpack.c.l.b16 %v247
      %v472 = vunpack.c.l.b16 %v248
      %v473 = vunpack.c.l.b16 %v249
      %v474 = vunpack.c.l.b16 %v250
      %v475 = vunpack.c.l.b16 %v251
      %v476 = vunpack.c.l.b16 %v252
      %v477 = vunpack.c.l.b16 %v253
      %v478 = vunpack.c.l.b16 %v254
      %v479 = vunpack.c.l.b16 %v255
      %v480 = vunpack.c.l.b16 %v256
      %v481 = vunpack.c.l.b16 %v257
      %v482 = vunpack.c.l.b16 %v258
      %v483 = vunpack.c.l.b16 %v259
      %v484 = vunpack.c.l.b16 %v260
      %v485 = vunpack.c.l.b16 %v261
      %v486 = vunpack.c.l.b16 %v262
      %v487 = vunpack.c.l.b16 %v263
      %v488 = vunpack.c.l.b16 %v264
      %v489 = vunpack.c.l.b16 %v265
      %v490 = vunpack.c.l.b16 %v266
      %v491 = vunpack.c.l.b16 %v267
      %v492 = vunpack.c.l.b16 %v268
      %v493 = vunpack.c.l.b16 %v269
      %v494 = vunpack.c.l.b16 %v270
      %v495 = vunpack.c.l.b16 %v271
      %v496 = vunpack.c.l.b16 %v272
      %v497 = vunpack.c.l.b16 %v273
      %v498 = vunpack.c.l.b16 %v274
      %v499 = vunpack.c.l.b16 %v275
      %v500 = vunpack.c.l.b16 %v276
      %v501 = vunpack.c.l.b16 %v277
      %v502 = vunpack.c.l.b16 %v278
      %v503 = vunpack.c.l.b16 %v279
      %v504 = vunpack.c.l.b16 %v280
      %v505 = vunpack.c.l.b16 %v281
      %v506 = vunpack.c.l.b16 %v282
      %v507 = vunpack.c.l.b16 %v283
      %v508 = vunpack.c.l.b16 %v284
      %v509 = vpack.c.b16 %v462, %v461
      %v510 = vpack.c.b16 %v464, %v463
      %v511 = vpack.c.b16 %v466, %v465
      %v512 = vpack.c.b16 %v468, %v467
      %v513 = vpack.c.b16 %v470, %v469
      %v514 = vpack.c.b16 %v472, %v471
      %v515 = vpack.c.b16 %v474, %v473
      %v516 = vpack.c.b16 %v476, %v475
      %v517 = vpack.c.b16 %v478, %v477
      %v518 = vpack.c.b16 %v480, %v479
      %v519 = vpack.c.b16 %v482, %v481
      %v520 = vpack.c.b16 %v484, %v483
      %v521 = vpack.c.b16 %v486, %v485
      %v522 = vpack.c.b16 %v488, %v487
      %v523 = vpack.c.b16 %v490, %v489
      %v524 = vpack.c.b16 %v492, %v491
      %v525 = vpack.c.b16 %v494, %v493
      %v526 = vpack.c.b16 %v496, %v495
      %v527 = vpack.c.b16 %v498, %v497
      %v528 = vpack.c.b16 %v500, %v499
      %v529 = vpack.c.b16 %v502, %v501
      %v530 = vpack.c.b16 %v504, %v503
      %v531 = vpack.c.b16 %v506, %v505
      %v532 = vpack.c.b16 %v508, %v507
      %557 = vmatprep.subr.bf16.mxu0 0
      %558 = vmatpush1.bf16.msra.mxu0 %v509
      %559 = vmatprep.subr.bf16.mxu0 0
      %560 = vmatpush1.bf16.msra.mxu0 %v510
      %561 = vmatprep.subr.bf16.mxu0 0
      %562 = vmatpush1.bf16.msra.mxu0 %v511
      %563 = vmatprep.subr.bf16.mxu0 0
      %564 = vmatpush1.bf16.msra.mxu0 %v512
      %565 = vmatprep.subr.bf16.mxu0 0
      %566 = vmatpush1.bf16.msra.mxu0 %v513
      %567 = vmatprep.subr.bf16.mxu0 0
      %568 = vmatpush1.bf16.msra.mxu0 %v514
      %569 = vmatprep.subr.bf16.mxu0 0
      %570 = vmatpush1.bf16.msra.mxu0 %v515
      %571 = vmatprep.subr.bf16.mxu0 0
      %572 = vmatpush1.bf16.msra.mxu0 %v516
      %573 = vmatprep.subr.bf16.mxu0 0
      %574 = vmatpush1.bf16.msra.mxu0 %v517
      %575 = vmatprep.subr.bf16.mxu0 0
      %576 = vmatpush1.bf16.msra.mxu0 %v518
      %577 = vmatprep.subr.bf16.mxu0 0
      %578 = vmatpush1.bf16.msra.mxu0 %v519
      %579 = vmatprep.subr.bf16.mxu0 0
      %580 = vmatpush1.bf16.msra.mxu0 %v520
      %581 = vmatprep.subr.bf16.mxu0 0
      %582 = vmatpush1.bf16.msra.mxu0 %v521
      %583 = vmatprep.subr.bf16.mxu0 0
      %584 = vmatpush1.bf16.msra.mxu0 %v522
      %585 = vmatprep.subr.bf16.mxu0 0
      %586 = vmatpush1.bf16.msra.mxu0 %v523
      %587 = vmatprep.subr.bf16.mxu0 0
      %588 = vmatpush1.bf16.msra.mxu0 %v524
      %589 = vmatprep.mubr.bf16.mxu0 %v366
      %590 = vmatmul.mubr.bf16.gmra.mrb[0].mxu0 %v365
      %v591 = vpop.f32.mrb[0].mxu0
      %v592 = vadd.f32 0.0, %v591
      %v593 = vpop.f32.mrb[0].mxu0
      %v594 = vpop.f32.mrb[0].mxu0
      %v595 = vadd.f32 0.0, %v594
      %v596 = vpop.f32.mrb[0].mxu0
      %597 = vmatprep.mubr.bf16.mxu0 %v369
      %598 = vmatmul.mubr.bf16.gmra.mrb[0].mxu0 %v368
      %v599 = vpop.f32.mrb[0].mxu0
      %v600 = vadd.f32 0.0, %v599
      %v601 = vpop.f32.mrb[0].mxu0
      %v602 = vpop.f32.mrb[0].mxu0
      %v603 = vadd.f32 0.0, %v602
      %v604 = vpop.f32.mrb[0].mxu0
      %605 = vmatprep.mubr.bf16.mxu0 %v372
      %606 = vmatmul.mubr.bf16.gmra.mrb[0].mxu0 %v371
      %v607 = vpop.f32.mrb[0].mxu0
      %v608 = vadd.f32 0.0, %v607
      %v609 = vpop.f32.mrb[0].mxu0
      %v610 = vpop.f32.mrb[0].mxu0
      %v611 = vadd.f32 0.0, %v610
      %v612 = vpop.f32.mrb[0].mxu0
      %613 = vmatprep.mubr.bf16.mxu0 %v375
      %614 = vmatmul.mubr.bf16.gmra.mrb[0].mxu0 %v374
      %v615 = vpop.f32.mrb[0].mxu0
      %v616 = vadd.f32 0.0, %v615
      %v617 = vpop.f32.mrb[0].mxu0
      %v618 = vpop.f32.mrb[0].mxu0
      %v619 = vadd.f32 0.0, %v618
      %v620 = vpop.f32.mrb[0].mxu0
      %621 = vmatprep.mubr.bf16.mxu0 %v378
      %622 = vmatmul.mubr.bf16.gmra.mrb[0].mxu0 %v377
      %v623 = vpop.f32.mrb[0].mxu0
      %v624 = vadd.f32 0.0, %v623
      %v625 = vpop.f32.mrb[0].mxu0
      %v626 = vpop.f32.mrb[0].mxu0
      %v627 = vadd.f32 0.0, %v626
      %v628 = vpop.f32.mrb[0].mxu0
      %629 = vmatprep.mubr.bf16.mxu0 %v381
      %630 = vmatmul.mubr.bf16.gmra.mrb[0].mxu0 %v380
      %v631 = vpop.f32.mrb[0].mxu0
      %v632 = vadd.f32 0.0, %v631
      %v633 = vpop.f32.mrb[0].mxu0
      %v634 = vpop.f32.mrb[0].mxu0
      %v635 = vadd.f32 0.0, %v634
      %v636 = vpop.f32.mrb[0].mxu0
      %637 = vmatprep.mubr.bf16.mxu0 %v384
      %638 = vmatmul.mubr.bf16.gmra.mrb[0].mxu0 %v383
      %v639 = vpop.f32.mrb[0].mxu0
      %v640 = vadd.f32 0.0, %v639
      %v641 = vpop.f32.mrb[0].mxu0
      %v642 = vpop.f32.mrb[0].mxu0
      %v643 = vadd.f32 0.0, %v642
      %v644 = vpop.f32.mrb[0].mxu0
      %645 = vmatprep.mubr.bf16.mxu0 %v387
      %646 = vmatmul.mubr.bf16.gmra.mrb[0].mxu0 %v386
      %v647 = vpop.f32.mrb[0].mxu0
      %v648 = vadd.f32 0.0, %v647
      %v649 = vpop.f32.mrb[0].mxu0
      %v650 = vpop.f32.mrb[0].mxu0
      %v651 = vadd.f32 0.0, %v650
      %v652 = vpop.f32.mrb[0].mxu0
      %653 = vdwg.mxu0
      %654 = vmatprep.subr.bf16.mxu0 0
      %655 = vmatpush1.bf16.msra.mxu0 %v525
      %656 = vmatprep.subr.bf16.mxu0 0
      %657 = vmatpush1.bf16.msra.mxu0 %v526
      %658 = vmatprep.subr.bf16.mxu0 0
      %659 = vmatpush1.bf16.msra.mxu0 %v527
      %660 = vmatprep.subr.bf16.mxu0 0
      %661 = vmatpush1.bf16.msra.mxu0 %v528
      %662 = vmatprep.subr.bf16.mxu0 0
      %663 = vmatpush1.bf16.msra.mxu0 %v529
      %664 = vmatprep.subr.bf16.mxu0 0
      %665 = vmatpush1.bf16.msra.mxu0 %v530
      %666 = vmatprep.subr.bf16.mxu0 0
      %667 = vmatpush1.bf16.msra.mxu0 %v531
      %668 = vmatprep.subr.bf16.mxu0 0
      %669 = vmatpush1.bf16.msra.mxu0 %v532
      %670 = vmatprep.subr.bf16.mxu0 0
      %671 = vmatpush1.bf16.msra.mxu0 0
      %672 = vmatprep.subr.bf16.mxu0 0
      %673 = vmatpush1.bf16.msra.mxu0 0
      %674 = vmatprep.subr.bf16.mxu0 0
      %675 = vmatpush1.bf16.msra.mxu0 0
      %676 = vmatprep.subr.bf16.mxu0 0
      %677 = vmatpush1.bf16.msra.mxu0 0
      %678 = vmatprep.subr.bf16.mxu0 0
      %679 = vmatpush1.bf16.msra.mxu0 0
      %680 = vmatprep.subr.bf16.mxu0 0
      %681 = vmatpush1.bf16.msra.mxu0 0
      %682 = vmatprep.subr.bf16.mxu0 0
      %683 = vmatpush1.bf16.msra.mxu0 0
      %684 = vmatprep.subr.bf16.mxu0 0
      %685 = vmatpush1.bf16.msra.mxu0 0
      %686 = vmatprep.mubr.bf16.mxu0 0
      %687 = vmatmul.mubr.bf16.gmra.mrb[0].mxu0 %v367
      %v688 = vpop.f32.mrb[0].mxu0
      %v689 = vadd.f32 %v592, %v688
      %v690 = vpop.f32.mrb[0].mxu0
      %v691 = vpop.f32.mrb[0].mxu0
      %v692 = vadd.f32 %v595, %v691
      %v693 = vpop.f32.mrb[0].mxu0
      %694 = vmatprep.mubr.bf16.mxu0 0
      %695 = vmatmul.mubr.bf16.gmra.mrb[0].mxu0 %v370
      %v696 = vpop.f32.mrb[0].mxu0
      %v697 = vadd.f32 %v600, %v696
      %v698 = vpop.f32.mrb[0].mxu0
      %v699 = vpop.f32.mrb[0].mxu0
      %v700 = vadd.f32 %v603, %v699
      %v701 = vpop.f32.mrb[0].mxu0
      %702 = vmatprep.mubr.bf16.mxu0 0
      %703 = vmatmul.mubr.bf16.gmra.mrb[0].mxu0 %v373
      %v704 = vpop.f32.mrb[0].mxu0
      %v705 = vadd.f32 %v608, %v704
      %v706 = vpop.f32.mrb[0].mxu0
      %v707 = vpop.f32.mrb[0].mxu0
      %v708 = vadd.f32 %v611, %v707
      %v709 = vpop.f32.mrb[0].mxu0
      %710 = vmatprep.mubr.bf16.mxu0 0
      %711 = vmatmul.mubr.bf16.gmra.mrb[0].mxu0 %v376
      %v712 = vpop.f32.mrb[0].mxu0
      %v713 = vadd.f32 %v616, %v712
      %v714 = vpop.f32.mrb[0].mxu0
      %v715 = vpop.f32.mrb[0].mxu0
      %v716 = vadd.f32 %v619, %v715
      %v717 = vpop.f32.mrb[0].mxu0
      %718 = vmatprep.mubr.bf16.mxu0 0
      %719 = vmatmul.mubr.bf16.gmra.mrb[0].mxu0 %v379
      %v720 = vpop.f32.mrb[0].mxu0
      %v721 = vadd.f32 %v624, %v720
      %v722 = vpop.f32.mrb[0].mxu0
      %v723 = vpop.f32.mrb[0].mxu0
      %v724 = vadd.f32 %v627, %v723
      %v725 = vpop.f32.mrb[0].mxu0
      %726 = vmatprep.mubr.bf16.mxu0 0
      %727 = vmatmul.mubr.bf16.gmra.mrb[0].mxu0 %v382
      %v728 = vpop.f32.mrb[0].mxu0
      %v729 = vadd.f32 %v632, %v728
      %v730 = vpop.f32.mrb[0].mxu0
      %v731 = vpop.f32.mrb[0].mxu0
      %v732 = vadd.f32 %v635, %v731
      %v733 = vpop.f32.mrb[0].mxu0
      %734 = vmatprep.mubr.bf16.mxu0 0
      %735 = vmatmul.mubr.bf16.gmra.mrb[0].mxu0 %v385
      %v736 = vpop.f32.mrb[0].mxu0
      %v737 = vadd.f32 %v640, %v736
      %v738 = vpop.f32.mrb[0].mxu0
      %v739 = vpop.f32.mrb[0].mxu0
      %v740 = vadd.f32 %v643, %v739
      %v741 = vpop.f32.mrb[0].mxu0
      %742 = vmatprep.mubr.bf16.mxu0 0
      %743 = vmatmul.mubr.bf16.gmra.mrb[0].mxu0 %v388
      %v744 = vpop.f32.mrb[0].mxu0
      %v745 = vadd.f32 %v648, %v744
      %v746 = vpop.f32.mrb[0].mxu0
      %v747 = vpop.f32.mrb[0].mxu0
      %v748 = vadd.f32 %v651, %v747
      %v749 = vpop.f32.mrb[0].mxu0
      %750 = vdwg.mxu0
      %v751 = vpack.c.bf16 %v692, %v689
      %v752 = vpack.c.bf16 %v700, %v697
      %v753 = vpack.c.bf16 %v708, %v705
      %v754 = vpack.c.bf16 %v716, %v713
      %v755 = vpack.c.bf16 %v724, %v721
      %v756 = vpack.c.bf16 %v732, %v729
      %v757 = vpack.c.bf16 %v740, %v737
      %v758 = vpack.c.bf16 %v748, %v745
      %v759 = vld [vmem:[%s2] sm:$0xf]
      %v760 = vld [vmem:[%s2 + $0x4] sm:$0xf]
      %v761 = vld [vmem:[%s2 + $0x8] sm:$0xf]
      %v762 = vld [vmem:[%s2 + $0xc] sm:$0xf]
      %v763 = vld [vmem:[%s2 + $0x10] sm:$0xf]
      %v764 = vld [vmem:[%s2 + $0x14] sm:$0xf]
      %v765 = vld [vmem:[%s2 + $0x18] sm:$0xf]
      %v766 = vld [vmem:[%s2 + $0x1c] sm:$0xf]
      %v767 = vld [vmem:[%s2 + $0x20] sm:$0xf]
      %v768 = vld [vmem:[%s2 + $0x24] sm:$0xf]
      %v769 = vld [vmem:[%s2 + $0x28] sm:$0xf]
      %v770 = vld [vmem:[%s2 + $0x2c] sm:$0xf]
      %v771 = vld [vmem:[%s2 + $0x30] sm:$0xf]
      %v772 = vld [vmem:[%s2 + $0x34] sm:$0xf]
      %v773 = vld [vmem:[%s2 + $0x38] sm:$0xf]
      %v774 = vld [vmem:[%s2 + $0x3c] sm:$0xf]
      %v775 = vld [vmem:[%s3] sm:$0x1]
      %v777 = vlaneseq
      %v778 = vshrl.u32 %v777, 7
      %v779 = vsub.s32 0, %v778
      %v780 = vrot.slane %v775, %v779
      %v798 = vunpack.c.l.b16 %v759
      %v799 = vunpack.c.l.b16 %v760
      %v800 = vunpack.c.l.b16 %v761
      %v801 = vunpack.c.l.b16 %v762
      %v802 = vunpack.c.l.b16 %v763
      %v803 = vunpack.c.l.b16 %v764
      %v804 = vunpack.c.l.b16 %v765
      %v805 = vunpack.c.l.b16 %v766
      %v806 = vunpack.c.l.b16 %v767
      %v807 = vunpack.c.l.b16 %v768
      %v808 = vunpack.c.l.b16 %v769
      %v809 = vunpack.c.l.b16 %v770
      %v810 = vunpack.c.l.b16 %v771
      %v811 = vunpack.c.l.b16 %v772
      %v812 = vunpack.c.l.b16 %v773
      %v813 = vunpack.c.l.b16 %v774
      %v814 = vpack.c.b16 %v799, %v798
      %v815 = vpack.c.b16 %v801, %v800
      %v816 = vpack.c.b16 %v803, %v802
      %v817 = vpack.c.b16 %v805, %v804
      %v818 = vpack.c.b16 %v807, %v806
      %v819 = vpack.c.b16 %v809, %v808
      %v820 = vpack.c.b16 %v811, %v810
      %v821 = vpack.c.b16 %v813, %v812
      %830 = vmatprep.subr.bf16.mxu0 0
      %831 = vmatpush1.bf16.msra.mxu0 %v814
      %832 = vmatprep.subr.bf16.mxu0 0
      %833 = vmatpush1.bf16.msra.mxu0 %v815
      %834 = vmatprep.subr.bf16.mxu0 0
      %835 = vmatpush1.bf16.msra.mxu0 %v816
      %836 = vmatprep.subr.bf16.mxu0 0
      %837 = vmatpush1.bf16.msra.mxu0 %v817
      %838 = vmatprep.subr.bf16.mxu0 0
      %839 = vmatpush1.bf16.msra.mxu0 %v818
      %840 = vmatprep.subr.bf16.mxu0 0
      %841 = vmatpush1.bf16.msra.mxu0 %v819
      %842 = vmatprep.subr.bf16.mxu0 0
      %843 = vmatpush1.bf16.msra.mxu0 %v820
      %844 = vmatprep.subr.bf16.mxu0 0
      %845 = vmatpush1.bf16.msra.mxu0 %v821
      %846 = vmatprep.subr.bf16.mxu0 0
      %847 = vmatpush1.bf16.msra.mxu0 0
      %848 = vmatprep.subr.bf16.mxu0 0
      %849 = vmatpush1.bf16.msra.mxu0 0
      %850 = vmatprep.subr.bf16.mxu0 0
      %851 = vmatpush1.bf16.msra.mxu0 0
      %852 = vmatprep.subr.bf16.mxu0 0
      %853 = vmatpush1.bf16.msra.mxu0 0
      %854 = vmatprep.subr.bf16.mxu0 0
      %855 = vmatpush1.bf16.msra.mxu0 0
      %856 = vmatprep.subr.bf16.mxu0 0
      %857 = vmatpush1.bf16.msra.mxu0 0
      %858 = vmatprep.subr.bf16.mxu0 0
      %859 = vmatpush1.bf16.msra.mxu0 0
      %860 = vmatprep.subr.bf16.mxu0 0
      %861 = vmatpush1.bf16.msra.mxu0 0
      %862 = vmatprep.mubr.bf16.mxu0 0
      %863 = vmatmul.mubr.bf16.gmra.mrb[0].mxu0 %v751
      %v864 = vpop.f32.mrb[0].mxu0
      %v865 = vadd.f32 %v780, %v864
      %v866 = vpop.f32.mrb[0].mxu0
      %v867 = vpop.f32.mrb[0].mxu0
      %v868 = vadd.f32 %v780, %v867
      %v869 = vpop.f32.mrb[0].mxu0
      %870 = vmatprep.mubr.bf16.mxu0 0
      %871 = vmatmul.mubr.bf16.gmra.mrb[0].mxu0 %v752
      %v872 = vpop.f32.mrb[0].mxu0
      %v873 = vadd.f32 %v780, %v872
      %v874 = vpop.f32.mrb[0].mxu0
      %v875 = vpop.f32.mrb[0].mxu0
      %v876 = vadd.f32 %v780, %v875
      %v877 = vpop.f32.mrb[0].mxu0
      %878 = vmatprep.mubr.bf16.mxu0 0
      %879 = vmatmul.mubr.bf16.gmra.mrb[0].mxu0 %v753
      %v880 = vpop.f32.mrb[0].mxu0
      %v881 = vadd.f32 %v780, %v880
      %v882 = vpop.f32.mrb[0].mxu0
      %v883 = vpop.f32.mrb[0].mxu0
      %v884 = vadd.f32 %v780, %v883
      %v885 = vpop.f32.mrb[0].mxu0
      %886 = vmatprep.mubr.bf16.mxu0 0
      %887 = vmatmul.mubr.bf16.gmra.mrb[0].mxu0 %v754
      %v888 = vpop.f32.mrb[0].mxu0
      %v889 = vadd.f32 %v780, %v888
      %v890 = vpop.f32.mrb[0].mxu0
      %v891 = vpop.f32.mrb[0].mxu0
      %v892 = vadd.f32 %v780, %v891
      %v893 = vpop.f32.mrb[0].mxu0
      %894 = vmatprep.mubr.bf16.mxu0 0
      %895 = vmatmul.mubr.bf16.gmra.mrb[0].mxu0 %v755
      %v896 = vpop.f32.mrb[0].mxu0
      %v897 = vadd.f32 %v780, %v896
      %v898 = vpop.f32.mrb[0].mxu0
      %v899 = vpop.f32.mrb[0].mxu0
      %v900 = vadd.f32 %v780, %v899
      %v901 = vpop.f32.mrb[0].mxu0
      %902 = vmatprep.mubr.bf16.mxu0 0
      %903 = vmatmul.mubr.bf16.gmra.mrb[0].mxu0 %v756
      %v904 = vpop.f32.mrb[0].mxu0
      %v905 = vadd.f32 %v780, %v904
      %v906 = vpop.f32.mrb[0].mxu0
      %v907 = vpop.f32.mrb[0].mxu0
      %v908 = vadd.f32 %v780, %v907
      %v909 = vpop.f32.mrb[0].mxu0
      %910 = vmatprep.mubr.bf16.mxu0 0
      %911 = vmatmul.mubr.bf16.gmra.mrb[0].mxu0 %v757
      %v912 = vpop.f32.mrb[0].mxu0
      %v913 = vadd.f32 %v780, %v912
      %v914 = vpop.f32.mrb[0].mxu0
      %v915 = vpop.f32.mrb[0].mxu0
      %v916 = vadd.f32 %v780, %v915
      %v917 = vpop.f32.mrb[0].mxu0
      %918 = vmatprep.mubr.bf16.mxu0 0
      %919 = vmatmul.mubr.bf16.gmra.mrb[0].mxu0 %v758
      %v920 = vpop.f32.mrb[0].mxu0
      %v921 = vadd.f32 %v780, %v920
      %v922 = vpop.f32.mrb[0].mxu0
      %v923 = vpop.f32.mrb[0].mxu0
      %v924 = vadd.f32 %v780, %v923
      %v925 = vpop.f32.mrb[0].mxu0
      %926 = vdwg.mxu0
      %v927 = vmax.f32 %v865, 0.0
      %v928 = vmax.f32 %v868, 0.0
      %v929 = vmax.f32 %v873, 0.0
      %v930 = vmax.f32 %v876, 0.0
      %v931 = vmax.f32 %v881, 0.0
      %v932 = vmax.f32 %v884, 0.0
      %v933 = vmax.f32 %v889, 0.0
      %v934 = vmax.f32 %v892, 0.0
      %v935 = vmax.f32 %v897, 0.0
      %v936 = vmax.f32 %v900, 0.0
      %v937 = vmax.f32 %v905, 0.0
      %v938 = vmax.f32 %v908, 0.0
      %v939 = vmax.f32 %v913, 0.0
      %v940 = vmax.f32 %v916, 0.0
      %v941 = vmax.f32 %v921, 0.0
      %v942 = vmax.f32 %v924, 0.0
      %v943 = vpack.c.bf16 %v928, %v927
      %v944 = vpack.c.bf16 %v930, %v929
      %v945 = vpack.c.bf16 %v932, %v931
      %v946 = vpack.c.bf16 %v934, %v933
      %v947 = vpack.c.bf16 %v936, %v935
      %v948 = vpack.c.bf16 %v938, %v937
      %v949 = vpack.c.bf16 %v940, %v939
      %v950 = vpack.c.bf16 %v942, %v941
      %v959 = vunpack.c.l.b16 %v943
      %v960 = vunpack.c.h.b16 %v943
      %v961 = vunpack.c.l.b16 %v944
      %v962 = vunpack.c.h.b16 %v944
      %v963 = vunpack.c.l.b16 %v945
      %v964 = vunpack.c.h.b16 %v945
      %v965 = vunpack.c.l.b16 %v946
      %v966 = vunpack.c.h.b16 %v946
      %v967 = vunpack.c.l.b16 %v947
      %v968 = vunpack.c.h.b16 %v947
      %v969 = vunpack.c.l.b16 %v948
      %v970 = vunpack.c.h.b16 %v948
      %v971 = vunpack.c.l.b16 %v949
      %v972 = vunpack.c.h.b16 %v949
      %v973 = vunpack.c.l.b16 %v950
      %v974 = vunpack.c.h.b16 %v950
      %v975 = vpack.c.b16 %v959, %v959
      %v976 = vpack.c.b16 %v960, %v960
      %v977 = vpack.c.b16 %v961, %v961
      %v978 = vpack.c.b16 %v962, %v962
      %v979 = vpack.c.b16 %v963, %v963
      %v980 = vpack.c.b16 %v964, %v964
      %v981 = vpack.c.b16 %v965, %v965
      %v982 = vpack.c.b16 %v966, %v966
      %v983 = vpack.c.b16 %v967, %v967
      %v984 = vpack.c.b16 %v968, %v968
      %v985 = vpack.c.b16 %v969, %v969
      %v986 = vpack.c.b16 %v970, %v970
      %v987 = vpack.c.b16 %v971, %v971
      %v988 = vpack.c.b16 %v972, %v972
      %v989 = vpack.c.b16 %v973, %v973
      %v990 = vpack.c.b16 %v974, %v974
      %1007 = vst [vmem:[%s202] sm:$0xf] %v975
      %1008 = vst [vmem:[%s202 + $0x4] sm:$0xf] %v976
      %1009 = vst [vmem:[%s202 + $0x8] sm:$0xf] %v977
      %1010 = vst [vmem:[%s202 + $0xc] sm:$0xf] %v978
      %1011 = vst [vmem:[%s202 + $0x10] sm:$0xf] %v979
      %1012 = vst [vmem:[%s202 + $0x14] sm:$0xf] %v980
      %1013 = vst [vmem:[%s202 + $0x18] sm:$0xf] %v981
      %1014 = vst [vmem:[%s202 + $0x1c] sm:$0xf] %v982
      %1015 = vst [vmem:[%s202 + $0x20] sm:$0xf] %v983
      %1016 = vst [vmem:[%s202 + $0x24] sm:$0xf] %v984
      %1017 = vst [vmem:[%s202 + $0x28] sm:$0xf] %v985
      %1018 = vst [vmem:[%s202 + $0x2c] sm:$0xf] %v986
      %1019 = vst [vmem:[%s202 + $0x30] sm:$0xf] %v987
      %1020 = vst [vmem:[%s202 + $0x34] sm:$0xf] %v988
      %1021 = vst [vmem:[%s202 + $0x38] sm:$0xf] %v989
      %1022 = vst [vmem:[%s202 + $0x3c] sm:$0xf] %v990
      %s1023 = smul.u32 16, %s15
      %p1024 = scmp.lt.s32.totalorder %s1023, 47
      %s1025 = scalar_select %p1024, %s1023, 47
      %s1026 = smul.addr %s1025, 4
      %s1027 = scalar_lea.vmem %s4, %s1026
      // Predicated region
      $region37: #{gcn_forward.3} parent=35 // pred_check
        %p1028 = pneg %p122
      $region38: #{gcn_forward.3} parent=35 // pred_check_branch
        %1030 = sbr.rel (%p1028) target = $region40
      $region39: #{gcn_forward.3} parent=35 // pred_region
        %s1031 = smul.u32 16, %s15
      $region40: #{gcn_forward.3} parent=35 // pred_fallthru
        _
    $region36: #{gcn_forward.3} parent=5 // pred_fallthru
      _
    %p1032 = scmp.le.s32.totalorder 2, %s10
    // Predicated region
    $region41: #{gcn_forward.3} parent=5 // pred_check
      %p1033 = pneg %p1032
    $region42: #{gcn_forward.3} parent=5 // pred_check_branch
      %1035 = sbr.rel (%p1033) target = $region44
    $region43: #{gcn_forward.3} parent=5 // pred_region
      %s1036 = ssub.s32 %s10, 2
      // Predicated region
      $region45: #{gcn_forward.3} parent=43 // pred_check
        %p1037 = pneg %p128
      $region46: #{gcn_forward.3} parent=43 // pred_check_branch
        %1039 = sbr.rel (%p1037) target = $region48
      $region47: #{gcn_forward.3} parent=43 // pred_region
        %s1040 = smul.u32 16, %s16
        %p1041 = scmp.lt.s32.totalorder %s1040, 47
        %s1042 = scalar_select %p1041, %s1040, 47
        %s1043 = smul.addr %s1042, 4
        %s1044 = scalar_lea.vmem %s4, %s1043
      $region48: #{gcn_forward.3} parent=43 // pred_fallthru
        _
    $region44: #{gcn_forward.3} parent=5 // pred_fallthru
      _
  $region6: #{gcn_forward.3} parent=0 // loop_footer
    %s14 = sadd.s32 1, %s10
  $region7: #{gcn_forward.3} parent=0 // loop_footer_branch
    %9 = sbr.rel target = $region3
  $region8: #{gcn_forward.3} parent=0 // loop_exit
    _

// kernel: gcn_forward.5
$region0: #{gcn_forward.5}
  #allocation0 [shape = 'u32[]', space=smem, size = 0x4, offset = 0x4, fixed_abs, tag = 'smem constant byte address 0x4 - core index']
  #allocation1 [shape = 'u32[144,128]{1,0:T(1,128)}', space=vmem, size = 0x12000, scoped, tag = 'internal scratch']
  %s0 = inlined_call_operand.vmem [shape: bf16[384,384], index: 0, kind: input, shape index: {}]
  %s1 = inlined_call_operand.vmem [shape: bf16[384,128], index: 1, kind: input, shape index: {}]
  %s2 = inlined_call_operand.vmem [shape: bf16[128,128], index: 2, kind: input, shape index: {}]
  %s3 = inlined_call_operand.vmem [shape: f32[1,128], index: 3, kind: input, shape index: {}]
  %s4 = inlined_call_operand.vmem [shape: f32[384,128], index: 4, kind: output, shape index: {}]
  %s5 = sld [smem:[#allocation0]]
  $region49: #{gcn_forward.5} parent=0
    _
  %s7 = ssub.s32 1, %s5
  %s8 = scalar_select 0, %s7, %s5
  loop: start=0, step=1, limit=5
  $region2: #{gcn_forward.5} parent=0 // loop_pre_header
    _
  $region3: #{gcn_forward.5} parent=0 // loop_header
    %s10 = sphi 0, %s14
    %p11 = scmp.ge.s32.totalorder %s10, 5
    %s20 = sphi 0, %s22
    %s23 = sphi 0, %s20
    %s24 = sphi 0, %s23
    %s40 = sphi 0, %s24
    %s44 = sphi 0, %s44
    %s46 = sphi 0, %s44
    %s47 = sphi 0, %s46
    %s61 = sphi 0, %s47
    %s65 = sphi 0, %s65
    %s67 = sphi 0, %s65
    %s68 = sphi 0, %s67
    %s82 = sphi 0, %s68
    %s86 = sphi 0, %s86
    %s88 = sphi 0, %s86
    %s89 = sphi 0, %s88
    %s103 = sphi 0, %s89
    %s109 = sphi 0, %s111
    %s112 = sphi 0, %s109
    %s113 = sphi 0, %s112
    %s129 = sphi 0, %s113
  $region4: #{gcn_forward.5} parent=0 // loop_header_branch
    %13 = sbr.rel (%p11) target = $region8
  $region5: #{gcn_forward.5} parent=0 // loop_body
    %s15 = ssub.s32 %s10, 1
    %s16 = ssub.s32 %s10, 2
    %s17 = sadd.s32 %s10, 1
    %s18 = ssub.s32 %s10, %s17
    %p19 = scmp.eq.s32.totalorder %s18, 0
    %s21 = sadd.s32 %s20, 1
    %s22 = scalar_select %p19, %s20, %s21
    %p25 = pneg %p19
    %p26 = scmp.eq.s32.totalorder %s10, 2
    %p27 = por %p25, %p26
    %p28 = scmp.ne.s32.totalorder %s20, %s23
    %p29 = scmp.eq.s32.totalorder %s10, 0
    %p30 = por %p28, %p29
    %p31 = scmp.ne.s32.totalorder %s20, %s23
    %p32 = scmp.eq.s32.totalorder %s15, 2
    %p33 = por %p31, %p32
    %p34 = scmp.ne.s32.totalorder %s23, %s24
    %p35 = scmp.eq.s32.totalorder %s15, 0
    %p36 = por %p34, %p35
    %p37 = scmp.ne.s32.totalorder %s23, %s24
    %p38 = scmp.eq.s32.totalorder %s16, 2
    %p39 = por %p37, %p38
    %p41 = scmp.ne.s32.totalorder %s24, %s40
    %p42 = scmp.eq.s32.totalorder %s16, 0
    %p43 = por %p41, %p42
    %s45 = sadd.s32 %s44, 1
    %p48 = scmp.eq.s32.totalorder %s10, 2
    %p49 = scmp.ne.s32.totalorder %s44, %s46
    %p50 = scmp.eq.s32.totalorder %s10, 0
    %p51 = por %p49, %p50
    %p52 = scmp.ne.s32.totalorder %s44, %s46
    %p53 = scmp.eq.s32.totalorder %s15, 2
    %p54 = por %p52, %p53
    %p55 = scmp.ne.s32.totalorder %s46, %s47
    %p56 = scmp.eq.s32.totalorder %s15, 0
    %p57 = por %p55, %p56
    %p58 = scmp.ne.s32.totalorder %s46, %s47
    %p59 = scmp.eq.s32.totalorder %s16, 2
    %p60 = por %p58, %p59
    %p62 = scmp.ne.s32.totalorder %s47, %s61
    %p63 = scmp.eq.s32.totalorder %s16, 0
    %p64 = por %p62, %p63
    %s66 = sadd.s32 %s65, 1
    %p69 = scmp.eq.s32.totalorder %s10, 2
    %p70 = scmp.ne.s32.totalorder %s65, %s67
    %p71 = scmp.eq.s32.totalorder %s10, 0
    %p72 = por %p70, %p71
    %p73 = scmp.ne.s32.totalorder %s65, %s67
    %p74 = scmp.eq.s32.totalorder %s15, 2
    %p75 = por %p73, %p74
    %p76 = scmp.ne.s32.totalorder %s67, %s68
    %p77 = scmp.eq.s32.totalorder %s15, 0
    %p78 = por %p76, %p77
    %p79 = scmp.ne.s32.totalorder %s67, %s68
    %p80 = scmp.eq.s32.totalorder %s16, 2
    %p81 = por %p79, %p80
    %p83 = scmp.ne.s32.totalorder %s68, %s82
    %p84 = scmp.eq.s32.totalorder %s16, 0
    %p85 = por %p83, %p84
    %s87 = sadd.s32 %s86, 1
    %p90 = scmp.eq.s32.totalorder %s10, 2
    %p91 = scmp.ne.s32.totalorder %s86, %s88
    %p92 = scmp.eq.s32.totalorder %s10, 0
    %p93 = por %p91, %p92
    %p94 = scmp.ne.s32.totalorder %s86, %s88
    %p95 = scmp.eq.s32.totalorder %s15, 2
    %p96 = por %p94, %p95
    %p97 = scmp.ne.s32.totalorder %s88, %s89
    %p98 = scmp.eq.s32.totalorder %s15, 0
    %p99 = por %p97, %p98
    %p100 = scmp.ne.s32.totalorder %s88, %s89
    %p101 = scmp.eq.s32.totalorder %s16, 2
    %p102 = por %p100, %p101
    %p104 = scmp.ne.s32.totalorder %s89, %s103
    %p105 = scmp.eq.s32.totalorder %s16, 0
    %p106 = por %p104, %p105
    %s107 = ssub.s32 %s10, %s17
    %p108 = scmp.eq.s32.totalorder %s107, 0
    %s110 = sadd.s32 %s109, 1
    %s111 = scalar_select %p108, %s109, %s110
    %p114 = pneg %p108
    %p115 = scmp.eq.s32.totalorder %s10, 2
    %p116 = por %p114, %p115
    %p117 = scmp.ne.s32.totalorder %s109, %s112
    %p118 = scmp.eq.s32.totalorder %s10, 0
    %p119 = por %p117, %p118
    %p120 = scmp.ne.s32.totalorder %s109, %s112
    %p121 = scmp.eq.s32.totalorder %s15, 2
    %p122 = por %p120, %p121
    %p123 = scmp.ne.s32.totalorder %s112, %s113
    %p124 = scmp.eq.s32.totalorder %s15, 0
    %p125 = por %p123, %p124
    %p126 = scmp.ne.s32.totalorder %s112, %s113
    %p127 = scmp.eq.s32.totalorder %s16, 2
    %p128 = por %p126, %p127
    %p130 = scmp.ne.s32.totalorder %s113, %s129
    %p131 = scmp.eq.s32.totalorder %s16, 0
    %p132 = por %p130, %p131
    %p133 = scmp.le.s32.totalorder 1, %s10
    %p134 = scmp.lt.s32.totalorder %s10, 4
    %p135 = pnand %p133, %p134
    %p136 = pneg %p135
    // Predicated region
    $region9: #{gcn_forward.5} parent=5 // pred_check
      _
    $region10: #{gcn_forward.5} parent=5 // pred_check_branch
      %138 = sbr.rel (%p135) target = $region12
    $region11: #{gcn_forward.5} parent=5 // pred_region
      %s139 = ssub.s32 %s10, 1
      // Predicated region
      $region13: #{gcn_forward.5} parent=11 // pred_check
        %p140 = pneg %p57
      $region14: #{gcn_forward.5} parent=11 // pred_check_branch
        %142 = sbr.rel (%p140) target = $region16
      $region15: #{gcn_forward.5} parent=11 // pred_region
        _
      $region16: #{gcn_forward.5} parent=11 // pred_fallthru
        _
      // Predicated region
      $region17: #{gcn_forward.5} parent=11 // pred_check
        %p143 = pneg %p78
      $region18: #{gcn_forward.5} parent=11 // pred_check_branch
        %145 = sbr.rel (%p143) target = $region20
      $region19: #{gcn_forward.5} parent=11 // pred_region
        _
      $region20: #{gcn_forward.5} parent=11 // pred_fallthru
        _
      // Predicated region
      $region21: #{gcn_forward.5} parent=11 // pred_check
        %p146 = pneg %p99
      $region22: #{gcn_forward.5} parent=11 // pred_check_branch
        %148 = sbr.rel (%p146) target = $region24
      $region23: #{gcn_forward.5} parent=11 // pred_region
        _
      $region24: #{gcn_forward.5} parent=11 // pred_fallthru
        _
    $region12: #{gcn_forward.5} parent=5 // pred_fallthru
      _
    %p149 = scmp.lt.s32.totalorder %s10, 3
    // Predicated region
    $region25: #{gcn_forward.5} parent=5 // pred_check
      %p150 = pneg %p149
    $region26: #{gcn_forward.5} parent=5 // pred_check_branch
      %152 = sbr.rel (%p150) target = $region28
    $region27: #{gcn_forward.5} parent=5 // pred_region
      // Predicated region
      $region29: #{gcn_forward.5} parent=27 // pred_check
        %p153 = pneg %p30
      $region30: #{gcn_forward.5} parent=27 // pred_check_branch
        %155 = sbr.rel (%p153) target = $region32
      $region31: #{gcn_forward.5} parent=27 // pred_region
        %s156 = smul.u32 16, %s10
        %p157 = scmp.lt.s32.totalorder %s156, 47
        %s158 = scalar_select %p157, %s156, 47
        %s159 = smul.addr %s158, 3
        %s160 = smul.addr %s159, 4
        %s161 = scalar_lea.vmem %s0, %s160
        %s162 = smul.u32 16, %s10
      $region32: #{gcn_forward.5} parent=27 // pred_fallthru
        _
    $region28: #{gcn_forward.5} parent=5 // pred_fallthru
      _
    %p163 = scmp.le.s32.totalorder 1, %s10
    %p164 = scmp.lt.s32.totalorder %s10, 4
    %p165 = pnand %p163, %p164
    %p166 = pneg %p165
    // Predicated region
    $region33: #{gcn_forward.5} parent=5 // pred_check
      _
    $region34: #{gcn_forward.5} parent=5 // pred_check_branch
      %168 = sbr.rel (%p165) target = $region36
    $region35: #{gcn_forward.5} parent=5 // pred_region
      %s169 = ssub.s32 %s10, 1
      %s170 = smul.u32 16, %s15
      %p171 = scmp.lt.s32.totalorder %s170, 47
      %s172 = scalar_select %p171, %s170, 47
      %s173 = smul.addr %s172, 3
      %s174 = smul.addr %s173, 4
      %s175 = scalar_lea.vmem %s0, %s174
      %p176 = pneg %p36
      %p177 = pneg %p33
      %p178 = pneg %p57
      %p179 = pneg %p54
      %p180 = pneg %p78
      %p181 = pneg %p75
      %p182 = pneg %p99
      %p183 = pneg %p96
      %p184 = pneg %p125
      %p185 = pneg %p122
      %s186 = smul.u32 16, %s15
      %p187 = scmp.lt.s32.totalorder %s186, 47
      %s188 = scalar_select %p187, %s186, 47
      %s189 = smul.addr %s188, 8
      %s190 = scalar_lea.vmem %s4, %s189
      %s191 = smul.u32 16, %s15
      %p192 = scmp.lt.s32.totalorder %s191, 47
      %s193 = scalar_select %p192, %s191, 47
      %s194 = smul.addr %s193, 3
      %s195 = smul.addr %s194, 4
      %s196 = scalar_lea.vmem %s0, %s195
      %s197 = smul.u32 16, %s15
      %s198 = smul.u32 16, %s15
      %p199 = scmp.lt.s32.totalorder %s198, 47
      %s200 = scalar_select %p199, %s198, 47
      %s201 = smul.addr %s200, 8
      %s202 = scalar_lea.vmem %s4, %s201
      %s203 = smul.u32 16, %s15
      %v205 = vld [vmem:[%s196] sm:$0xff]
      %v206 = vld [vmem:[%s196 + $0x8] sm:$0xf]
      %v207 = vld [vmem:[%s196 + $0xc] sm:$0xff]
      %v208 = vld [vmem:[%s196 + $0x14] sm:$0xf]
      %v209 = vld [vmem:[%s196 + $0x18] sm:$0xff]
      %v210 = vld [vmem:[%s196 + $0x20] sm:$0xf]
      %v211 = vld [vmem:[%s196 + $0x24] sm:$0xff]
      %v212 = vld [vmem:[%s196 + $0x2c] sm:$0xf]
      %v213 = vld [vmem:[%s196 + $0x30] sm:$0xff]
      %v214 = vld [vmem:[%s196 + $0x38] sm:$0xf]
      %v215 = vld [vmem:[%s196 + $0x3c] sm:$0xff]
      %v216 = vld [vmem:[%s196 + $0x44] sm:$0xf]
      %v217 = vld [vmem:[%s196 + $0x48] sm:$0xff]
      %v218 = vld [vmem:[%s196 + $0x50] sm:$0xf]
      %v219 = vld [vmem:[%s196 + $0x54] sm:$0xff]
      %v220 = vld [vmem:[%s196 + $0x5c] sm:$0xf]
      %v221 = vld [vmem:[%s196 + $0x60] sm:$0xff]
      %v222 = vld [vmem:[%s196 + $0x68] sm:$0xf]
      %v223 = vld [vmem:[%s196 + $0x6c] sm:$0xff]
      %v224 = vld [vmem:[%s196 + $0x74] sm:$0xf]
      %v225 = vld [vmem:[%s196 + $0x78] sm:$0xff]
      %v226 = vld [vmem:[%s196 + $0x80] sm:$0xf]
      %v227 = vld [vmem:[%s196 + $0x84] sm:$0xff]
      %v228 = vld [vmem:[%s196 + $0x8c] sm:$0xf]
      %v229 = vld [vmem:[%s196 + $0x90] sm:$0xff]
      %v230 = vld [vmem:[%s196 + $0x98] sm:$0xf]
      %v231 = vld [vmem:[%s196 + $0x9c] sm:$0xff]
      %v232 = vld [vmem:[%s196 + $0xa4] sm:$0xf]
      %v233 = vld [vmem:[%s196 + $0xa8] sm:$0xff]
      %v234 = vld [vmem:[%s196 + $0xb0] sm:$0xf]
      %v235 = vld [vmem:[%s196 + $0xb4] sm:$0xff]
      %v236 = vld [vmem:[%s196 + $0xbc] sm:$0xf]
      %v237 = vld [vmem:[%s1] sm:$0xf]
      %v238 = vld [vmem:[%s1 + $0x4] sm:$0xf]
      %v239 = vld [vmem:[%s1 + $0x8] sm:$0xf]
      %v240 = vld [vmem:[%s1 + $0xc] sm:$0xf]
      %v241 = vld [vmem:[%s1 + $0x10] sm:$0xf]
      %v242 = vld [vmem:[%s1 + $0x14] sm:$0xf]
      %v243 = vld [vmem:[%s1 + $0x18] sm:$0xf]
      %v244 = vld [vmem:[%s1 + $0x1c] sm:$0xf]
      %v245 = vld [vmem:[%s1 + $0x20] sm:$0xf]
      %v246 = vld [vmem:[%s1 + $0x24] sm:$0xf]
      %v247 = vld [vmem:[%s1 + $0x28] sm:$0xf]
      %v248 = vld [vmem:[%s1 + $0x2c] sm:$0xf]
      %v249 = vld [vmem:[%s1 + $0x30] sm:$0xf]
      %v250 = vld [vmem:[%s1 + $0x34] sm:$0xf]
      %v251 = vld [vmem:[%s1 + $0x38] sm:$0xf]
      %v252 = vld [vmem:[%s1 + $0x3c] sm:$0xf]
      %v253 = vld [vmem:[%s1 + $0x40] sm:$0xf]
      %v254 = vld [vmem:[%s1 + $0x44] sm:$0xf]
      %v255 = vld [vmem:[%s1 + $0x48] sm:$0xf]
      %v256 = vld [vmem:[%s1 + $0x4c] sm:$0xf]
      %v257 = vld [vmem:[%s1 + $0x50] sm:$0xf]
      %v258 = vld [vmem:[%s1 + $0x54] sm:$0xf]
      %v259 = vld [vmem:[%s1 + $0x58] sm:$0xf]
      %v260 = vld [vmem:[%s1 + $0x5c] sm:$0xf]
      %v261 = vld [vmem:[%s1 + $0x60] sm:$0xf]
      %v262 = vld [vmem:[%s1 + $0x64] sm:$0xf]
      %v263 = vld [vmem:[%s1 + $0x68] sm:$0xf]
      %v264 = vld [vmem:[%s1 + $0x6c] sm:$0xf]
      %v265 = vld [vmem:[%s1 + $0x70] sm:$0xf]
      %v266 = vld [vmem:[%s1 + $0x74] sm:$0xf]
      %v267 = vld [vmem:[%s1 + $0x78] sm:$0xf]
      %v268 = vld [vmem:[%s1 + $0x7c] sm:$0xf]
      %v269 = vld [vmem:[%s1 + $0x80] sm:$0xf]
      %v270 = vld [vmem:[%s1 + $0x84] sm:$0xf]
      %v271 = vld [vmem:[%s1 + $0x88] sm:$0xf]
      %v272 = vld [vmem:[%s1 + $0x8c] sm:$0xf]
      %v273 = vld [vmem:[%s1 + $0x90] sm:$0xf]
      %v274 = vld [vmem:[%s1 + $0x94] sm:$0xf]
      %v275 = vld [vmem:[%s1 + $0x98] sm:$0xf]
      %v276 = vld [vmem:[%s1 + $0x9c] sm:$0xf]
      %v277 = vld [vmem:[%s1 + $0xa0] sm:$0xf]
      %v278 = vld [vmem:[%s1 + $0xa4] sm:$0xf]
      %v279 = vld [vmem:[%s1 + $0xa8] sm:$0xf]
      %v280 = vld [vmem:[%s1 + $0xac] sm:$0xf]
      %v281 = vld [vmem:[%s1 + $0xb0] sm:$0xf]
      %v282 = vld [vmem:[%s1 + $0xb4] sm:$0xf]
      %v283 = vld [vmem:[%s1 + $0xb8] sm:$0xf]
      %v284 = vld [vmem:[%s1 + $0xbc] sm:$0xf]
      %v317 = vunpack.c.l.b16 %v205
      %v318 = vunpack.c.h.b16 %v205
      %v319 = vunpack.c.l.b16 %v206
      %v320 = vunpack.c.l.b16 %v207
      %v321 = vunpack.c.h.b16 %v207
      %v322 = vunpack.c.l.b16 %v208
      %v323 = vunpack.c.l.b16 %v209
      %v324 = vunpack.c.h.b16 %v209
      %v325 = vunpack.c.l.b16 %v210
      %v326 = vunpack.c.l.b16 %v211
      %v327 = vunpack.c.h.b16 %v211
      %v328 = vunpack.c.l.b16 %v212
      %v329 = vunpack.c.l.b16 %v213
      %v330 = vunpack.c.h.b16 %v213
      %v331 = vunpack.c.l.b16 %v214
      %v332 = vunpack.c.l.b16 %v215
      %v333 = vunpack.c.h.b16 %v215
      %v334 = vunpack.c.l.b16 %v216
      %v335 = vunpack.c.l.b16 %v217
      %v336 = vunpack.c.h.b16 %v217
      %v337 = vunpack.c.l.b16 %v218
      %v338 = vunpack.c.l.b16 %v219
      %v339 = vunpack.c.h.b16 %v219
      %v340 = vunpack.c.l.b16 %v220
      %v341 = vunpack.c.l.b16 %v221
      %v342 = vunpack.c.h.b16 %v221
      %v343 = vunpack.c.l.b16 %v222
      %v344 = vunpack.c.l.b16 %v223
      %v345 = vunpack.c.h.b16 %v223
      %v346 = vunpack.c.l.b16 %v224
      %v347 = vunpack.c.l.b16 %v225
      %v348 = vunpack.c.h.b16 %v225
      %v349 = vunpack.c.l.b16 %v226
      %v350 = vunpack.c.l.b16 %v227
      %v351 = vunpack.c.h.b16 %v227
      %v352 = vunpack.c.l.b16 %v228
      %v353 = vunpack.c.l.b16 %v229
      %v354 = vunpack.c.h.b16 %v229
      %v355 = vunpack.c.l.b16 %v230
      %v356 = vunpack.c.l.b16 %v231
      %v357 = vunpack.c.h.b16 %v231
      %v358 = vunpack.c.l.b16 %v232
      %v359 = vunpack.c.l.b16 %v233
      %v360 = vunpack.c.h.b16 %v233
      %v361 = vunpack.c.l.b16 %v234
      %v362 = vunpack.c.l.b16 %v235
      %v363 = vunpack.c.h.b16 %v235
      %v364 = vunpack.c.l.b16 %v236
      %v365 = vpack.c.b16 %v320, %v317
      %v366 = vpack.c.b16 %v321, %v318
      %v367 = vpack.c.b16 %v322, %v319
      %v368 = vpack.c.b16 %v326, %v323
      %v369 = vpack.c.b16 %v327, %v324
      %v370 = vpack.c.b16 %v328, %v325
      %v371 = vpack.c.b16 %v332, %v329
      %v372 = vpack.c.b16 %v333, %v330
      %v373 = vpack.c.b16 %v334, %v331
      %v374 = vpack.c.b16 %v338, %v335
      %v375 = vpack.c.b16 %v339, %v336
      %v376 = vpack.c.b16 %v340, %v337
      %v377 = vpack.c.b16 %v344, %v341
      %v378 = vpack.c.b16 %v345, %v342
      %v379 = vpack.c.b16 %v346, %v343
      %v380 = vpack.c.b16 %v350, %v347
      %v381 = vpack.c.b16 %v351, %v348
      %v382 = vpack.c.b16 %v352, %v349
      %v383 = vpack.c.b16 %v356, %v353
      %v384 = vpack.c.b16 %v357, %v354
      %v385 = vpack.c.b16 %v358, %v355
      %v386 = vpack.c.b16 %v362, %v359
      %v387 = vpack.c.b16 %v363, %v360
      %v388 = vpack.c.b16 %v364, %v361
      %v461 = vunpack.c.l.b16 %v237
      %v462 = vunpack.c.l.b16 %v238
      %v463 = vunpack.c.l.b16 %v239
      %v464 = vunpack.c.l.b16 %v240
      %v465 = vunpack.c.l.b16 %v241
      %v466 = vunpack.c.l.b16 %v242
      %v467 = vunpack.c.l.b16 %v243
      %v468 = vunpack.c.l.b16 %v244
      %v469 = vunpack.c.l.b16 %v245
      %v470 = vunpack.c.l.b16 %v246
      %v471 = vunpack.c.l.b16 %v247
      %v472 = vunpack.c.l.b16 %v248
      %v473 = vunpack.c.l.b16 %v249
      %v474 = vunpack.c.l.b16 %v250
      %v475 = vunpack.c.l.b16 %v251
      %v476 = vunpack.c.l.b16 %v252
      %v477 = vunpack.c.l.b16 %v253
      %v478 = vunpack.c.l.b16 %v254
      %v479 = vunpack.c.l.b16 %v255
      %v480 = vunpack.c.l.b16 %v256
      %v481 = vunpack.c.l.b16 %v257
      %v482 = vunpack.c.l.b16 %v258
      %v483 = vunpack.c.l.b16 %v259
      %v484 = vunpack.c.l.b16 %v260
      %v485 = vunpack.c.l.b16 %v261
      %v486 = vunpack.c.l.b16 %v262
      %v487 = vunpack.c.l.b16 %v263
      %v488 = vunpack.c.l.b16 %v264
      %v489 = vunpack.c.l.b16 %v265
      %v490 = vunpack.c.l.b16 %v266
      %v491 = vunpack.c.l.b16 %v267
      %v492 = vunpack.c.l.b16 %v268
      %v493 = vunpack.c.l.b16 %v269
      %v494 = vunpack.c.l.b16 %v270
      %v495 = vunpack.c.l.b16 %v271
      %v496 = vunpack.c.l.b16 %v272
      %v497 = vunpack.c.l.b16 %v273
      %v498 = vunpack.c.l.b16 %v274
      %v499 = vunpack.c.l.b16 %v275
      %v500 = vunpack.c.l.b16 %v276
      %v501 = vunpack.c.l.b16 %v277
      %v502 = vunpack.c.l.b16 %v278
      %v503 = vunpack.c.l.b16 %v279
      %v504 = vunpack.c.l.b16 %v280
      %v505 = vunpack.c.l.b16 %v281
      %v506 = vunpack.c.l.b16 %v282
      %v507 = vunpack.c.l.b16 %v283
      %v508 = vunpack.c.l.b16 %v284
      %v509 = vpack.c.b16 %v462, %v461
      %v510 = vpack.c.b16 %v464, %v463
      %v511 = vpack.c.b16 %v466, %v465
      %v512 = vpack.c.b16 %v468, %v467
      %v513 = vpack.c.b16 %v470, %v469
      %v514 = vpack.c.b16 %v472, %v471
      %v515 = vpack.c.b16 %v474, %v473
      %v516 = vpack.c.b16 %v476, %v475
      %v517 = vpack.c.b16 %v478, %v477
      %v518 = vpack.c.b16 %v480, %v479
      %v519 = vpack.c.b16 %v482, %v481
      %v520 = vpack.c.b16 %v484, %v483
      %v521 = vpack.c.b16 %v486, %v485
      %v522 = vpack.c.b16 %v488, %v487
      %v523 = vpack.c.b16 %v490, %v489
      %v524 = vpack.c.b16 %v492, %v491
      %v525 = vpack.c.b16 %v494, %v493
      %v526 = vpack.c.b16 %v496, %v495
      %v527 = vpack.c.b16 %v498, %v497
      %v528 = vpack.c.b16 %v500, %v499
      %v529 = vpack.c.b16 %v502, %v501
      %v530 = vpack.c.b16 %v504, %v503
      %v531 = vpack.c.b16 %v506, %v505
      %v532 = vpack.c.b16 %v508, %v507
      %557 = vmatprep.subr.bf16.mxu0 0
      %558 = vmatpush1.bf16.msra.mxu0 %v509
      %559 = vmatprep.subr.bf16.mxu0 0
      %560 = vmatpush1.bf16.msra.mxu0 %v510
      %561 = vmatprep.subr.bf16.mxu0 0
      %562 = vmatpush1.bf16.msra.mxu0 %v511
      %563 = vmatprep.subr.bf16.mxu0 0
      %564 = vmatpush1.bf16.msra.mxu0 %v512
      %565 = vmatprep.subr.bf16.mxu0 0
      %566 = vmatpush1.bf16.msra.mxu0 %v513
      %567 = vmatprep.subr.bf16.mxu0 0
      %568 = vmatpush1.bf16.msra.mxu0 %v514
      %569 = vmatprep.subr.bf16.mxu0 0
      %570 = vmatpush1.bf16.msra.mxu0 %v515
      %571 = vmatprep.subr.bf16.mxu0 0
      %572 = vmatpush1.bf16.msra.mxu0 %v516
      %573 = vmatprep.subr.bf16.mxu0 0
      %574 = vmatpush1.bf16.msra.mxu0 %v517
      %575 = vmatprep.subr.bf16.mxu0 0
      %576 = vmatpush1.bf16.msra.mxu0 %v518
      %577 = vmatprep.subr.bf16.mxu0 0
      %578 = vmatpush1.bf16.msra.mxu0 %v519
      %579 = vmatprep.subr.bf16.mxu0 0
      %580 = vmatpush1.bf16.msra.mxu0 %v520
      %581 = vmatprep.subr.bf16.mxu0 0
      %582 = vmatpush1.bf16.msra.mxu0 %v521
      %583 = vmatprep.subr.bf16.mxu0 0
      %584 = vmatpush1.bf16.msra.mxu0 %v522
      %585 = vmatprep.subr.bf16.mxu0 0
      %586 = vmatpush1.bf16.msra.mxu0 %v523
      %587 = vmatprep.subr.bf16.mxu0 0
      %588 = vmatpush1.bf16.msra.mxu0 %v524
      %589 = vmatprep.mubr.bf16.mxu0 %v366
      %590 = vmatmul.mubr.bf16.gmra.mrb[0].mxu0 %v365
      %v591 = vpop.f32.mrb[0].mxu0
      %v592 = vadd.f32 0.0, %v591
      %v593 = vpop.f32.mrb[0].mxu0
      %v594 = vpop.f32.mrb[0].mxu0
      %v595 = vadd.f32 0.0, %v594
      %v596 = vpop.f32.mrb[0].mxu0
      %597 = vmatprep.mubr.bf16.mxu0 %v369
      %598 = vmatmul.mubr.bf16.gmra.mrb[0].mxu0 %v368
      %v599 = vpop.f32.mrb[0].mxu0
      %v600 = vadd.f32 0.0, %v599
      %v601 = vpop.f32.mrb[0].mxu0
      %v602 = vpop.f32.mrb[0].mxu0
      %v603 = vadd.f32 0.0, %v602
      %v604 = vpop.f32.mrb[0].mxu0
      %605 = vmatprep.mubr.bf16.mxu0 %v372
      %606 = vmatmul.mubr.bf16.gmra.mrb[0].mxu0 %v371
      %v607 = vpop.f32.mrb[0].mxu0
      %v608 = vadd.f32 0.0, %v607
      %v609 = vpop.f32.mrb[0].mxu0
      %v610 = vpop.f32.mrb[0].mxu0
      %v611 = vadd.f32 0.0, %v610
      %v612 = vpop.f32.mrb[0].mxu0
      %613 = vmatprep.mubr.bf16.mxu0 %v375
      %614 = vmatmul.mubr.bf16.gmra.mrb[0].mxu0 %v374
      %v615 = vpop.f32.mrb[0].mxu0
      %v616 = vadd.f32 0.0, %v615
      %v617 = vpop.f32.mrb[0].mxu0
      %v618 = vpop.f32.mrb[0].mxu0
      %v619 = vadd.f32 0.0, %v618
      %v620 = vpop.f32.mrb[0].mxu0
      %621 = vmatprep.mubr.bf16.mxu0 %v378
      %622 = vmatmul.mubr.bf16.gmra.mrb[0].mxu0 %v377
      %v623 = vpop.f32.mrb[0].mxu0
      %v624 = vadd.f32 0.0, %v623
      %v625 = vpop.f32.mrb[0].mxu0
      %v626 = vpop.f32.mrb[0].mxu0
      %v627 = vadd.f32 0.0, %v626
      %v628 = vpop.f32.mrb[0].mxu0
      %629 = vmatprep.mubr.bf16.mxu0 %v381
      %630 = vmatmul.mubr.bf16.gmra.mrb[0].mxu0 %v380
      %v631 = vpop.f32.mrb[0].mxu0
      %v632 = vadd.f32 0.0, %v631
      %v633 = vpop.f32.mrb[0].mxu0
      %v634 = vpop.f32.mrb[0].mxu0
      %v635 = vadd.f32 0.0, %v634
      %v636 = vpop.f32.mrb[0].mxu0
      %637 = vmatprep.mubr.bf16.mxu0 %v384
      %638 = vmatmul.mubr.bf16.gmra.mrb[0].mxu0 %v383
      %v639 = vpop.f32.mrb[0].mxu0
      %v640 = vadd.f32 0.0, %v639
      %v641 = vpop.f32.mrb[0].mxu0
      %v642 = vpop.f32.mrb[0].mxu0
      %v643 = vadd.f32 0.0, %v642
      %v644 = vpop.f32.mrb[0].mxu0
      %645 = vmatprep.mubr.bf16.mxu0 %v387
      %646 = vmatmul.mubr.bf16.gmra.mrb[0].mxu0 %v386
      %v647 = vpop.f32.mrb[0].mxu0
      %v648 = vadd.f32 0.0, %v647
      %v649 = vpop.f32.mrb[0].mxu0
      %v650 = vpop.f32.mrb[0].mxu0
      %v651 = vadd.f32 0.0, %v650
      %v652 = vpop.f32.mrb[0].mxu0
      %653 = vdwg.mxu0
      %654 = vmatprep.subr.bf16.mxu0 0
      %655 = vmatpush1.bf16.msra.mxu0 %v525
      %656 = vmatprep.subr.bf16.mxu0 0
      %657 = vmatpush1.bf16.msra.mxu0 %v526
      %658 = vmatprep.subr.bf16.mxu0 0
      %659 = vmatpush1.bf16.msra.mxu0 %v527
      %660 = vmatprep.subr.bf16.mxu0 0
      %661 = vmatpush1.bf16.msra.mxu0 %v528
      %662 = vmatprep.subr.bf16.mxu0 0
      %663 = vmatpush1.bf16.msra.mxu0 %v529
      %664 = vmatprep.subr.bf16.mxu0 0
      %665 = vmatpush1.bf16.msra.mxu0 %v530
      %666 = vmatprep.subr.bf16.mxu0 0
      %667 = vmatpush1.bf16.msra.mxu0 %v531
      %668 = vmatprep.subr.bf16.mxu0 0
      %669 = vmatpush1.bf16.msra.mxu0 %v532
      %670 = vmatprep.subr.bf16.mxu0 0
      %671 = vmatpush1.bf16.msra.mxu0 0
      %672 = vmatprep.subr.bf16.mxu0 0
      %673 = vmatpush1.bf16.msra.mxu0 0
      %674 = vmatprep.subr.bf16.mxu0 0
      %675 = vmatpush1.bf16.msra.mxu0 0
      %676 = vmatprep.subr.bf16.mxu0 0
      %677 = vmatpush1.bf16.msra.mxu0 0
      %678 = vmatprep.subr.bf16.mxu0 0
      %679 = vmatpush1.bf16.msra.mxu0 0
      %680 = vmatprep.subr.bf16.mxu0 0
      %681 = vmatpush1.bf16.msra.mxu0 0
      %682 = vmatprep.subr.bf16.mxu0 0
      %683 = vmatpush1.bf16.msra.mxu0 0
      %684 = vmatprep.subr.bf16.mxu0 0
      %685 = vmatpush1.bf16.msra.mxu0 0
      %686 = vmatprep.mubr.bf16.mxu0 0
      %687 = vmatmul.mubr.bf16.gmra.mrb[0].mxu0 %v367
      %v688 = vpop.f32.mrb[0].mxu0
      %v689 = vadd.f32 %v592, %v688
      %v690 = vpop.f32.mrb[0].mxu0
      %v691 = vpop.f32.mrb[0].mxu0
      %v692 = vadd.f32 %v595, %v691
      %v693 = vpop.f32.mrb[0].mxu0
      %694 = vmatprep.mubr.bf16.mxu0 0
      %695 = vmatmul.mubr.bf16.gmra.mrb[0].mxu0 %v370
      %v696 = vpop.f32.mrb[0].mxu0
      %v697 = vadd.f32 %v600, %v696
      %v698 = vpop.f32.mrb[0].mxu0
      %v699 = vpop.f32.mrb[0].mxu0
      %v700 = vadd.f32 %v603, %v699
      %v701 = vpop.f32.mrb[0].mxu0
      %702 = vmatprep.mubr.bf16.mxu0 0
      %703 = vmatmul.mubr.bf16.gmra.mrb[0].mxu0 %v373
      %v704 = vpop.f32.mrb[0].mxu0
      %v705 = vadd.f32 %v608, %v704
      %v706 = vpop.f32.mrb[0].mxu0
      %v707 = vpop.f32.mrb[0].mxu0
      %v708 = vadd.f32 %v611, %v707
      %v709 = vpop.f32.mrb[0].mxu0
      %710 = vmatprep.mubr.bf16.mxu0 0
      %711 = vmatmul.mubr.bf16.gmra.mrb[0].mxu0 %v376
      %v712 = vpop.f32.mrb[0].mxu0
      %v713 = vadd.f32 %v616, %v712
      %v714 = vpop.f32.mrb[0].mxu0
      %v715 = vpop.f32.mrb[0].mxu0
      %v716 = vadd.f32 %v619, %v715
      %v717 = vpop.f32.mrb[0].mxu0
      %718 = vmatprep.mubr.bf16.mxu0 0
      %719 = vmatmul.mubr.bf16.gmra.mrb[0].mxu0 %v379
      %v720 = vpop.f32.mrb[0].mxu0
      %v721 = vadd.f32 %v624, %v720
      %v722 = vpop.f32.mrb[0].mxu0
      %v723 = vpop.f32.mrb[0].mxu0
      %v724 = vadd.f32 %v627, %v723
      %v725 = vpop.f32.mrb[0].mxu0
      %726 = vmatprep.mubr.bf16.mxu0 0
      %727 = vmatmul.mubr.bf16.gmra.mrb[0].mxu0 %v382
      %v728 = vpop.f32.mrb[0].mxu0
      %v729 = vadd.f32 %v632, %v728
      %v730 = vpop.f32.mrb[0].mxu0
      %v731 = vpop.f32.mrb[0].mxu0
      %v732 = vadd.f32 %v635, %v731
      %v733 = vpop.f32.mrb[0].mxu0
      %734 = vmatprep.mubr.bf16.mxu0 0
      %735 = vmatmul.mubr.bf16.gmra.mrb[0].mxu0 %v385
      %v736 = vpop.f32.mrb[0].mxu0
      %v737 = vadd.f32 %v640, %v736
      %v738 = vpop.f32.mrb[0].mxu0
      %v739 = vpop.f32.mrb[0].mxu0
      %v740 = vadd.f32 %v643, %v739
      %v741 = vpop.f32.mrb[0].mxu0
      %742 = vmatprep.mubr.bf16.mxu0 0
      %743 = vmatmul.mubr.bf16.gmra.mrb[0].mxu0 %v388
      %v744 = vpop.f32.mrb[0].mxu0
      %v745 = vadd.f32 %v648, %v744
      %v746 = vpop.f32.mrb[0].mxu0
      %v747 = vpop.f32.mrb[0].mxu0
      %v748 = vadd.f32 %v651, %v747
      %v749 = vpop.f32.mrb[0].mxu0
      %750 = vdwg.mxu0
      %v751 = vpack.c.bf16 %v692, %v689
      %v752 = vpack.c.bf16 %v700, %v697
      %v753 = vpack.c.bf16 %v708, %v705
      %v754 = vpack.c.bf16 %v716, %v713
      %v755 = vpack.c.bf16 %v724, %v721
      %v756 = vpack.c.bf16 %v732, %v729
      %v757 = vpack.c.bf16 %v740, %v737
      %v758 = vpack.c.bf16 %v748, %v745
      %v759 = vld [vmem:[%s2] sm:$0xf]
      %v760 = vld [vmem:[%s2 + $0x4] sm:$0xf]
      %v761 = vld [vmem:[%s2 + $0x8] sm:$0xf]
      %v762 = vld [vmem:[%s2 + $0xc] sm:$0xf]
      %v763 = vld [vmem:[%s2 + $0x10] sm:$0xf]
      %v764 = vld [vmem:[%s2 + $0x14] sm:$0xf]
      %v765 = vld [vmem:[%s2 + $0x18] sm:$0xf]
      %v766 = vld [vmem:[%s2 + $0x1c] sm:$0xf]
      %v767 = vld [vmem:[%s2 + $0x20] sm:$0xf]
      %v768 = vld [vmem:[%s2 + $0x24] sm:$0xf]
      %v769 = vld [vmem:[%s2 + $0x28] sm:$0xf]
      %v770 = vld [vmem:[%s2 + $0x2c] sm:$0xf]
      %v771 = vld [vmem:[%s2 + $0x30] sm:$0xf]
      %v772 = vld [vmem:[%s2 + $0x34] sm:$0xf]
      %v773 = vld [vmem:[%s2 + $0x38] sm:$0xf]
      %v774 = vld [vmem:[%s2 + $0x3c] sm:$0xf]
      %v775 = vld [vmem:[%s3] sm:$0x1]
      %v777 = vlaneseq
      %v778 = vshrl.u32 %v777, 7
      %v779 = vsub.s32 0, %v778
      %v780 = vrot.slane %v775, %v779
      %v798 = vunpack.c.l.b16 %v759
      %v799 = vunpack.c.l.b16 %v760
      %v800 = vunpack.c.l.b16 %v761
      %v801 = vunpack.c.l.b16 %v762
      %v802 = vunpack.c.l.b16 %v763
      %v803 = vunpack.c.l.b16 %v764
      %v804 = vunpack.c.l.b16 %v765
      %v805 = vunpack.c.l.b16 %v766
      %v806 = vunpack.c.l.b16 %v767
      %v807 = vunpack.c.l.b16 %v768
      %v808 = vunpack.c.l.b16 %v769
      %v809 = vunpack.c.l.b16 %v770
      %v810 = vunpack.c.l.b16 %v771
      %v811 = vunpack.c.l.b16 %v772
      %v812 = vunpack.c.l.b16 %v773
      %v813 = vunpack.c.l.b16 %v774
      %v814 = vpack.c.b16 %v799, %v798
      %v815 = vpack.c.b16 %v801, %v800
      %v816 = vpack.c.b16 %v803, %v802
      %v817 = vpack.c.b16 %v805, %v804
      %v818 = vpack.c.b16 %v807, %v806
      %v819 = vpack.c.b16 %v809, %v808
      %v820 = vpack.c.b16 %v811, %v810
      %v821 = vpack.c.b16 %v813, %v812
      %830 = vmatprep.subr.bf16.mxu0 0
      %831 = vmatpush1.bf16.msra.mxu0 %v814
      %832 = vmatprep.subr.bf16.mxu0 0
      %833 = vmatpush1.bf16.msra.mxu0 %v815
      %834 = vmatprep.subr.bf16.mxu0 0
      %835 = vmatpush1.bf16.msra.mxu0 %v816
      %836 = vmatprep.subr.bf16.mxu0 0
      %837 = vmatpush1.bf16.msra.mxu0 %v817
      %838 = vmatprep.subr.bf16.mxu0 0
      %839 = vmatpush1.bf16.msra.mxu0 %v818
      %840 = vmatprep.subr.bf16.mxu0 0
      %841 = vmatpush1.bf16.msra.mxu0 %v819
      %842 = vmatprep.subr.bf16.mxu0 0
      %843 = vmatpush1.bf16.msra.mxu0 %v820
      %844 = vmatprep.subr.bf16.mxu0 0
      %845 = vmatpush1.bf16.msra.mxu0 %v821
      %846 = vmatprep.subr.bf16.mxu0 0
      %847 = vmatpush1.bf16.msra.mxu0 0
      %848 = vmatprep.subr.bf16.mxu0 0
      %849 = vmatpush1.bf16.msra.mxu0 0
      %850 = vmatprep.subr.bf16.mxu0 0
      %851 = vmatpush1.bf16.msra.mxu0 0
      %852 = vmatprep.subr.bf16.mxu0 0
      %853 = vmatpush1.bf16.msra.mxu0 0
      %854 = vmatprep.subr.bf16.mxu0 0
      %855 = vmatpush1.bf16.msra.mxu0 0
      %856 = vmatprep.subr.bf16.mxu0 0
      %857 = vmatpush1.bf16.msra.mxu0 0
      %858 = vmatprep.subr.bf16.mxu0 0
      %859 = vmatpush1.bf16.msra.mxu0 0
      %860 = vmatprep.subr.bf16.mxu0 0
      %861 = vmatpush1.bf16.msra.mxu0 0
      %862 = vmatprep.mubr.bf16.mxu0 0
      %863 = vmatmul.mubr.bf16.gmra.mrb[0].mxu0 %v751
      %v864 = vpop.f32.mrb[0].mxu0
      %v865 = vadd.f32 %v780, %v864
      %v866 = vpop.f32.mrb[0].mxu0
      %v867 = vpop.f32.mrb[0].mxu0
      %v868 = vadd.f32 %v780, %v867
      %v869 = vpop.f32.mrb[0].mxu0
      %870 = vmatprep.mubr.bf16.mxu0 0
      %871 = vmatmul.mubr.bf16.gmra.mrb[0].mxu0 %v752
      %v872 = vpop.f32.mrb[0].mxu0
      %v873 = vadd.f32 %v780, %v872
      %v874 = vpop.f32.mrb[0].mxu0
      %v875 = vpop.f32.mrb[0].mxu0
      %v876 = vadd.f32 %v780, %v875
      %v877 = vpop.f32.mrb[0].mxu0
      %878 = vmatprep.mubr.bf16.mxu0 0
      %879 = vmatmul.mubr.bf16.gmra.mrb[0].mxu0 %v753
      %v880 = vpop.f32.mrb[0].mxu0
      %v881 = vadd.f32 %v780, %v880
      %v882 = vpop.f32.mrb[0].mxu0
      %v883 = vpop.f32.mrb[0].mxu0
      %v884 = vadd.f32 %v780, %v883
      %v885 = vpop.f32.mrb[0].mxu0
      %886 = vmatprep.mubr.bf16.mxu0 0
      %887 = vmatmul.mubr.bf16.gmra.mrb[0].mxu0 %v754
      %v888 = vpop.f32.mrb[0].mxu0
      %v889 = vadd.f32 %v780, %v888
      %v890 = vpop.f32.mrb[0].mxu0
      %v891 = vpop.f32.mrb[0].mxu0
      %v892 = vadd.f32 %v780, %v891
      %v893 = vpop.f32.mrb[0].mxu0
      %894 = vmatprep.mubr.bf16.mxu0 0
      %895 = vmatmul.mubr.bf16.gmra.mrb[0].mxu0 %v755
      %v896 = vpop.f32.mrb[0].mxu0
      %v897 = vadd.f32 %v780, %v896
      %v898 = vpop.f32.mrb[0].mxu0
      %v899 = vpop.f32.mrb[0].mxu0
      %v900 = vadd.f32 %v780, %v899
      %v901 = vpop.f32.mrb[0].mxu0
      %902 = vmatprep.mubr.bf16.mxu0 0
      %903 = vmatmul.mubr.bf16.gmra.mrb[0].mxu0 %v756
      %v904 = vpop.f32.mrb[0].mxu0
      %v905 = vadd.f32 %v780, %v904
      %v906 = vpop.f32.mrb[0].mxu0
      %v907 = vpop.f32.mrb[0].mxu0
      %v908 = vadd.f32 %v780, %v907
      %v909 = vpop.f32.mrb[0].mxu0
      %910 = vmatprep.mubr.bf16.mxu0 0
      %911 = vmatmul.mubr.bf16.gmra.mrb[0].mxu0 %v757
      %v912 = vpop.f32.mrb[0].mxu0
      %v913 = vadd.f32 %v780, %v912
      %v914 = vpop.f32.mrb[0].mxu0
      %v915 = vpop.f32.mrb[0].mxu0
      %v916 = vadd.f32 %v780, %v915
      %v917 = vpop.f32.mrb[0].mxu0
      %918 = vmatprep.mubr.bf16.mxu0 0
      %919 = vmatmul.mubr.bf16.gmra.mrb[0].mxu0 %v758
      %v920 = vpop.f32.mrb[0].mxu0
      %v921 = vadd.f32 %v780, %v920
      %v922 = vpop.f32.mrb[0].mxu0
      %v923 = vpop.f32.mrb[0].mxu0
      %v924 = vadd.f32 %v780, %v923
      %v925 = vpop.f32.mrb[0].mxu0
      %926 = vdwg.mxu0
      %v927 = vlaneseq
      %v928 = vand.u32 %v927, 127
      %vm929 = vcmp.lt.s32.totalorder %v928, 8
      %v930 = vsel %vm929, %v865, -inf
      %v931 = vsel %vm929, %v868, -inf
      %v932 = vsel %vm929, %v873, -inf
      %v933 = vsel %vm929, %v876, -inf
      %v934 = vsel %vm929, %v881, -inf
      %v935 = vsel %vm929, %v884, -inf
      %v936 = vsel %vm929, %v889, -inf
      %v937 = vsel %vm929, %v892, -inf
      %v938 = vsel %vm929, %v897, -inf
      %v939 = vsel %vm929, %v900, -inf
      %v940 = vsel %vm929, %v905, -inf
      %v941 = vsel %vm929, %v908, -inf
      %v942 = vsel %vm929, %v913, -inf
      %v943 = vsel %vm929, %v916, -inf
      %v944 = vsel %vm929, %v921, -inf
      %v945 = vsel %vm929, %v924, -inf
      %946 = vmax.xlane.f32.xlu0 %v930
      %v947 = vpop.xlane.xlu0 %946
      %948 = vmax.xlane.f32.xlu0 %v931
      %v949 = vpop.xlane.xlu0 %948
      %950 = vmax.xlane.f32.xlu0 %v932
      %v951 = vpop.xlane.xlu0 %950
      %952 = vmax.xlane.f32.xlu0 %v933
      %v953 = vpop.xlane.xlu0 %952
      %954 = vmax.xlane.f32.xlu0 %v934
      %v955 = vpop.xlane.xlu0 %954
      %956 = vmax.xlane.f32.xlu0 %v935
      %v957 = vpop.xlane.xlu0 %956
      %958 = vmax.xlane.f32.xlu0 %v936
      %v959 = vpop.xlane.xlu0 %958
      %960 = vmax.xlane.f32.xlu0 %v937
      %v961 = vpop.xlane.xlu0 %960
      %962 = vmax.xlane.f32.xlu0 %v938
      %v963 = vpop.xlane.xlu0 %962
      %964 = vmax.xlane.f32.xlu0 %v939
      %v965 = vpop.xlane.xlu0 %964
      %966 = vmax.xlane.f32.xlu0 %v940
      %v967 = vpop.xlane.xlu0 %966
      %968 = vmax.xlane.f32.xlu0 %v941
      %v969 = vpop.xlane.xlu0 %968
      %970 = vmax.xlane.f32.xlu0 %v942
      %v971 = vpop.xlane.xlu0 %970
      %972 = vmax.xlane.f32.xlu0 %v943
      %v973 = vpop.xlane.xlu0 %972
      %974 = vmax.xlane.f32.xlu0 %v944
      %v975 = vpop.xlane.xlu0 %974
      %976 = vmax.xlane.f32.xlu0 %v945
      %v977 = vpop.xlane.xlu0 %976
      %v978 = vsub.f32 %v865, %v947
      %v979 = vsub.f32 %v868, %v949
      %v980 = vsub.f32 %v873, %v951
      %v981 = vsub.f32 %v876, %v953
      %v982 = vsub.f32 %v881, %v955
      %v983 = vsub.f32 %v884, %v957
      %v984 = vsub.f32 %v889, %v959
      %v985 = vsub.f32 %v892, %v961
      %v986 = vsub.f32 %v897, %v963
      %v987 = vsub.f32 %v900, %v965
      %v988 = vsub.f32 %v905, %v967
      %v989 = vsub.f32 %v908, %v969
      %v990 = vsub.f32 %v913, %v971
      %v991 = vsub.f32 %v916, %v973
      %v992 = vsub.f32 %v921, %v975
      %v993 = vsub.f32 %v924, %v977
      %v994 = vmul.f32 %v978, 1.442695
      %v995 = vpow.pop %v994
      %v996 = vmul.f32 %v979, 1.442695
      %v997 = vpow.pop %v996
      %v998 = vmul.f32 %v980, 1.442695
      %v999 = vpow.pop %v998
      %v1000 = vmul.f32 %v981, 1.442695
      %v1001 = vpow.pop %v1000
      %v1002 = vmul.f32 %v982, 1.442695
      %v1003 = vpow.pop %v1002
      %v1004 = vmul.f32 %v983, 1.442695
      %v1005 = vpow.pop %v1004
      %v1006 = vmul.f32 %v984, 1.442695
      %v1007 = vpow.pop %v1006
      %v1008 = vmul.f32 %v985, 1.442695
      %v1009 = vpow.pop %v1008
      %v1010 = vmul.f32 %v986, 1.442695
      %v1011 = vpow.pop %v1010
      %v1012 = vmul.f32 %v987, 1.442695
      %v1013 = vpow.pop %v1012
      %v1014 = vmul.f32 %v988, 1.442695
      %v1015 = vpow.pop %v1014
      %v1016 = vmul.f32 %v989, 1.442695
      %v1017 = vpow.pop %v1016
      %v1018 = vmul.f32 %v990, 1.442695
      %v1019 = vpow.pop %v1018
      %v1020 = vmul.f32 %v991, 1.442695
      %v1021 = vpow.pop %v1020
      %v1022 = vmul.f32 %v992, 1.442695
      %v1023 = vpow.pop %v1022
      %v1024 = vmul.f32 %v993, 1.442695
      %v1025 = vpow.pop %v1024
      %v1026 = vsel %vm929, %v995, 0.0
      %v1027 = vsel %vm929, %v997, 0.0
      %v1028 = vsel %vm929, %v999, 0.0
      %v1029 = vsel %vm929, %v1001, 0.0
      %v1030 = vsel %vm929, %v1003, 0.0
      %v1031 = vsel %vm929, %v1005, 0.0
      %v1032 = vsel %vm929, %v1007, 0.0
      %v1033 = vsel %vm929, %v1009, 0.0
      %v1034 = vsel %vm929, %v1011, 0.0
      %v1035 = vsel %vm929, %v1013, 0.0
      %v1036 = vsel %vm929, %v1015, 0.0
      %v1037 = vsel %vm929, %v1017, 0.0
      %v1038 = vsel %vm929, %v1019, 0.0
      %v1039 = vsel %vm929, %v1021, 0.0
      %v1040 = vsel %vm929, %v1023, 0.0
      %v1041 = vsel %vm929, %v1025, 0.0
      %1042 = vadd.xlane.f32.xlu0 %v1026
      %v1043 = vpop.xlane.xlu0 %1042
      %1044 = vadd.xlane.f32.xlu0 %v1027
      %v1045 = vpop.xlane.xlu0 %1044
      %1046 = vadd.xlane.f32.xlu0 %v1028
      %v1047 = vpop.xlane.xlu0 %1046
      %1048 = vadd.xlane.f32.xlu0 %v1029
      %v1049 = vpop.xlane.xlu0 %1048
      %1050 = vadd.xlane.f32.xlu0 %v1030
      %v1051 = vpop.xlane.xlu0 %1050
      %1052 = vadd.xlane.f32.xlu0 %v1031
      %v1053 = vpop.xlane.xlu0 %1052
      %1054 = vadd.xlane.f32.xlu0 %v1032
      %v1055 = vpop.xlane.xlu0 %1054
      %1056 = vadd.xlane.f32.xlu0 %v1033
      %v1057 = vpop.xlane.xlu0 %1056
      %1058 = vadd.xlane.f32.xlu0 %v1034
      %v1059 = vpop.xlane.xlu0 %1058
      %1060 = vadd.xlane.f32.xlu0 %v1035
      %v1061 = vpop.xlane.xlu0 %1060
      %1062 = vadd.xlane.f32.xlu0 %v1036
      %v1063 = vpop.xlane.xlu0 %1062
      %1064 = vadd.xlane.f32.xlu0 %v1037
      %v1065 = vpop.xlane.xlu0 %1064
      %1066 = vadd.xlane.f32.xlu0 %v1038
      %v1067 = vpop.xlane.xlu0 %1066
      %1068 = vadd.xlane.f32.xlu0 %v1039
      %v1069 = vpop.xlane.xlu0 %1068
      %1070 = vadd.xlane.f32.xlu0 %v1040
      %v1071 = vpop.xlane.xlu0 %1070
      %1072 = vadd.xlane.f32.xlu0 %v1041
      %v1073 = vpop.xlane.xlu0 %1072
      %v1074 = vlog2.pop %v1043
      %v1075 = vmul.f32 %v1074, 0.6931472
      %v1076 = vlog2.pop %v1045
      %v1077 = vmul.f32 %v1076, 0.6931472
      %v1078 = vlog2.pop %v1047
      %v1079 = vmul.f32 %v1078, 0.6931472
      %v1080 = vlog2.pop %v1049
      %v1081 = vmul.f32 %v1080, 0.6931472
      %v1082 = vlog2.pop %v1051
      %v1083 = vmul.f32 %v1082, 0.6931472
      %v1084 = vlog2.pop %v1053
      %v1085 = vmul.f32 %v1084, 0.6931472
      %v1086 = vlog2.pop %v1055
      %v1087 = vmul.f32 %v1086, 0.6931472
      %v1088 = vlog2.pop %v1057
      %v1089 = vmul.f32 %v1088, 0.6931472
      %v1090 = vlog2.pop %v1059
      %v1091 = vmul.f32 %v1090, 0.6931472
      %v1092 = vlog2.pop %v1061
      %v1093 = vmul.f32 %v1092, 0.6931472
      %v1094 = vlog2.pop %v1063
      %v1095 = vmul.f32 %v1094, 0.6931472
      %v1096 = vlog2.pop %v1065
      %v1097 = vmul.f32 %v1096, 0.6931472
      %v1098 = vlog2.pop %v1067
      %v1099 = vmul.f32 %v1098, 0.6931472
      %v1100 = vlog2.pop %v1069
      %v1101 = vmul.f32 %v1100, 0.6931472
      %v1102 = vlog2.pop %v1071
      %v1103 = vmul.f32 %v1102, 0.6931472
      %v1104 = vlog2.pop %v1073
      %v1105 = vmul.f32 %v1104, 0.6931472
      %v1106 = vsub.f32 %v978, %v1075
      %v1107 = vsub.f32 %v979, %v1077
      %v1108 = vsub.f32 %v980, %v1079
      %v1109 = vsub.f32 %v981, %v1081
      %v1110 = vsub.f32 %v982, %v1083
      %v1111 = vsub.f32 %v983, %v1085
      %v1112 = vsub.f32 %v984, %v1087
      %v1113 = vsub.f32 %v985, %v1089
      %v1114 = vsub.f32 %v986, %v1091
      %v1115 = vsub.f32 %v987, %v1093
      %v1116 = vsub.f32 %v988, %v1095
      %v1117 = vsub.f32 %v989, %v1097
      %v1118 = vsub.f32 %v990, %v1099
      %v1119 = vsub.f32 %v991, %v1101
      %v1120 = vsub.f32 %v992, %v1103
      %v1121 = vsub.f32 %v993, %v1105
      %1122 = vst [vmem:[%s202] sm:$0xff] %v1106
      %1123 = vst [vmem:[%s202 + $0x8] sm:$0xff] %v1107
      %1124 = vst [vmem:[%s202 + $0x10] sm:$0xff] %v1108
      %1125 = vst [vmem:[%s202 + $0x18] sm:$0xff] %v1109
      %1126 = vst [vmem:[%s202 + $0x20] sm:$0xff] %v1110
      %1127 = vst [vmem:[%s202 + $0x28] sm:$0xff] %v1111
      %1128 = vst [vmem:[%s202 + $0x30] sm:$0xff] %v1112
      %1129 = vst [vmem:[%s202 + $0x38] sm:$0xff] %v1113
      %1130 = vst [vmem:[%s202 + $0x40] sm:$0xff] %v1114
      %1131 = vst [vmem:[%s202 + $0x48] sm:$0xff] %v1115
      %1132 = vst [vmem:[%s202 + $0x50] sm:$0xff] %v1116
      %1133 = vst [vmem:[%s202 + $0x58] sm:$0xff] %v1117
      %1134 = vst [vmem:[%s202 + $0x60] sm:$0xff] %v1118
      %1135 = vst [vmem:[%s202 + $0x68] sm:$0xff] %v1119
      %1136 = vst [vmem:[%s202 + $0x70] sm:$0xff] %v1120
      %1137 = vst [vmem:[%s202 + $0x78] sm:$0xff] %v1121
      %s1138 = smul.u32 16, %s15
      %p1139 = scmp.lt.s32.totalorder %s1138, 47
      %s1140 = scalar_select %p1139, %s1138, 47
      %s1141 = smul.addr %s1140, 8
      %s1142 = scalar_lea.vmem %s4, %s1141
      // Predicated region
      $region37: #{gcn_forward.5} parent=35 // pred_check
        %p1143 = pneg %p122
      $region38: #{gcn_forward.5} parent=35 // pred_check_branch
        %1145 = sbr.rel (%p1143) target = $region40
      $region39: #{gcn_forward.5} parent=35 // pred_region
        %s1146 = smul.u32 16, %s15
      $region40: #{gcn_forward.5} parent=35 // pred_fallthru
        _
    $region36: #{gcn_forward.5} parent=5 // pred_fallthru
      _
    %p1147 = scmp.le.s32.totalorder 2, %s10
    // Predicated region
    $region41: #{gcn_forward.5} parent=5 // pred_check
      %p1148 = pneg %p1147
    $region42: #{gcn_forward.5} parent=5 // pred_check_branch
      %1150 = sbr.rel (%p1148) target = $region44
    $region43: #{gcn_forward.5} parent=5 // pred_region
      %s1151 = ssub.s32 %s10, 2
      // Predicated region
      $region45: #{gcn_forward.5} parent=43 // pred_check
        %p1152 = pneg %p128
      $region46: #{gcn_forward.5} parent=43 // pred_check_branch
        %1154 = sbr.rel (%p1152) target = $region48
      $region47: #{gcn_forward.5} parent=43 // pred_region
        %s1155 = smul.u32 16, %s16
        %p1156 = scmp.lt.s32.totalorder %s1155, 47
        %s1157 = scalar_select %p1156, %s1155, 47
        %s1158 = smul.addr %s1157, 8
        %s1159 = scalar_lea.vmem %s4, %s1158
      $region48: #{gcn_forward.5} parent=43 // pred_fallthru
        _
    $region44: #{gcn_forward.5} parent=5 // pred_fallthru
      _
  $region6: #{gcn_forward.5} parent=0 // loop_footer
    %s14 = sadd.s32 1, %s10
  $region7: #{gcn_forward.5} parent=0 // loop_footer_branch
    %9 = sbr.rel target = $region3
  $region8: #{gcn_forward.5} parent=0 // loop_exit
    _

</llo_original>
